<compile_context>
chip_gen: v6e
topology: v6e:2x2x1
jax: 0.10.0
libtpu: 0.0.40
codegen_flags: <defaults>
</compile_context>

<pallas_src>
import math

import jax
import jax.numpy as jnp
from jax import lax
from jax.experimental import pallas as pl
from jax.experimental.pallas import tpu as pltpu

BN_EPS = 1e-5


# ----------------------------------------------------------------------------
# Fused SeqNet kernel: 4-direction LSTM recurrence + 1x1 conv + BN + ReLU
# ----------------------------------------------------------------------------
def _seqnet_kernel(x_td_ref, x_lr_ref, wih_ref, bih_ref, whh_ref, wc_ref,
                   gam_ref, bet_ref, perm_ref, o_ref,
                   g_tdf, g_tdb, g_lrf, g_lrb,
                   h_tdf, h_tdb, h_lrf, h_lrb):
    T, B, C = x_td_ref.shape          # T == H == W == B (square spatial grid)
    Hh = whh_ref.shape[1]             # nHidden
    G4 = 4 * Hh                       # gates per direction (i, f, g, o)

    # ---- hoisted input projections: one MXU matmul per scan orientation ----
    xt = x_td_ref[...].reshape(T * B, C)      # row scan    : pixel (r, c) -> r*W + c
    xl = x_lr_ref[...].reshape(T * B, C)      # column scan : pixel (r, c) -> c*H + r
    wih = wih_ref[...]                        # (2, C, 8*Hh)  columns = [fw | bw]
    bih = bih_ref[...]                        # (2, 1, 8*Hh)
    gt = jnp.dot(xt, wih[0], preferred_element_type=jnp.float32) + bih[0]
    gl = jnp.dot(xl, wih[1], preferred_element_type=jnp.float32) + bih[1]
    g_tdf[...] = gt[:, 0:G4].reshape(T, B, G4)
    g_tdb[...] = gt[:, G4:2 * G4].reshape(T, B, G4)
    g_lrf[...] = gl[:, 0:G4].reshape(T, B, G4)
    g_lrb[...] = gl[:, G4:2 * G4].reshape(T, B, G4)

    whh = whh_ref[...]                        # (4, Hh, 4*Hh): tdf, tdb, lrf, lrb
    g_refs = (g_tdf, g_tdb, g_lrf, g_lrb)
    h_refs = (h_tdf, h_tdb, h_lrf, h_lrb)

    # ---- serial recurrence: all 4 directions advance together each step ----
    def step(s, carry):
        hs, cs = carry
        rs = T - 1 - s
        new_h, new_c = [], []
        for d in range(4):
            idx = s if d % 2 == 0 else rs     # even dirs scan forward, odd backward
            gin = g_refs[d][idx]              # (B, 4*Hh) precomputed x-projection
            gates = gin + jnp.dot(hs[d], whh[d],
                                  preferred_element_type=jnp.float32)
            i = jax.nn.sigmoid(gates[:, 0:Hh])
            f = jax.nn.sigmoid(gates[:, Hh:2 * Hh])
            g = jnp.tanh(gates[:, 2 * Hh:3 * Hh])
            o = jax.nn.sigmoid(gates[:, 3 * Hh:4 * Hh])
            c_new = f * cs[d] + i * g
            h_new = o * jnp.tanh(c_new)
            h_refs[d][idx] = h_new            # keyed by ORIGINAL sequence position
            new_h.append(h_new)
            new_c.append(c_new)
        return tuple(new_h), tuple(new_c)

    zeros = tuple(jnp.zeros((B, Hh), jnp.float32) for _ in range(4))
    lax.fori_loop(0, T, step, (zeros, zeros))

    # ---- epilogue: 1x1 conv (channel-major), training-mode BatchNorm, ReLU ----
    feat_td = jnp.concatenate([h_tdf[...], h_tdb[...]], axis=-1).reshape(T * B, 2 * Hh)
    feat_lr = jnp.concatenate([h_lrf[...], h_lrb[...]], axis=-1).reshape(T * B, 2 * Hh)
    wc = wc_ref[...]                          # (nOut, 4*Hh), cols = [td_fw td_bw lr_fw lr_bw]
    dn = (((1,), (1,)), ((), ()))             # contract the channel dim  (A @ B^T)
    y_td = lax.dot_general(wc[:, 0:2 * Hh], feat_td, dn,
                           preferred_element_type=jnp.float32)   # (nOut, H*W), row-major pixels
    y_lr = lax.dot_general(wc[:, 2 * Hh:4 * Hh], feat_lr, dn,
                           preferred_element_type=jnp.float32)   # (nOut, H*W), col-major pixels
    # bring the left-right partial result to row-major pixel order (permutation matmul)
    y = y_td + jnp.dot(y_lr, perm_ref[...], preferred_element_type=jnp.float32)
    mean = jnp.mean(y, axis=1, keepdims=True)
    var = jnp.mean((y - mean) ** 2, axis=1, keepdims=True)       # biased, like train-mode BN
    y = (y - mean) * lax.rsqrt(var + BN_EPS)
    y = y * gam_ref[...] + bet_ref[...]
    o_ref[...] = jnp.maximum(y, 0.0)          # (nOut, H*W): lane-dense store


def seqnet_forward(x_nchw, params):
    """x_nchw: (1, nIn, H, W) like the PyTorch module (batch must be 1)."""
    n_hidden = params["whh"].shape[1]
    n_out = params["wc"].shape[0]
    x = jnp.squeeze(x_nchw, axis=0)                        # (C, H, W)
    x = jnp.transpose(x, (1, 2, 0)).astype(jnp.float32)    # (H, W, C)
    H, W, _ = x.shape
    assert H == W, "fused SeqNet kernel assumes a square spatial grid"
    x_td = x                                               # top-down scan: seq over rows
    x_lr = jnp.swapaxes(x, 0, 1)                           # left-right scan: seq over cols

    # pixel permutation (column-major -> row-major), applied in-kernel on the MXU
    p = jnp.arange(H * W, dtype=jnp.int32)
    q_of_p = (p % H) * W + p // H
    perm = (q_of_p[:, None] == jnp.arange(H * W, dtype=jnp.int32)[None, :]
            ).astype(jnp.float32)

    vmem = pl.BlockSpec(memory_space=pltpu.MemorySpace.VMEM)
    g4 = 4 * n_hidden
    out = pl.pallas_call(
        _seqnet_kernel,
        out_shape=jax.ShapeDtypeStruct((n_out, H * W), jnp.float32),
        in_specs=[vmem] * 9,
        out_specs=vmem,
        scratch_shapes=(
            [pltpu.VMEM((H, W, g4), jnp.float32) for _ in range(4)]           # gate scratch
            + [pltpu.VMEM((H, W, n_hidden), jnp.float32) for _ in range(4)]   # hidden outputs
        ),
    )(x_td, x_lr, params["wih"], params["bih"], params["whh"], params["wc"],
      params["bn_g"], params["bn_b"], perm)
    return out.reshape(1, n_out, H, W)


# ----------------------------------------------------------------------------
# Deterministic synthetic parameters (PyTorch-style LSTM / conv / BN shapes)
# ----------------------------------------------------------------------------
def _make_lstm_dir(key, n_in, n_h):
    k1, k2, k3, k4 = jax.random.split(key, 4)
    bd = 1.0 / math.sqrt(n_h)
    return dict(
        wih=jax.random.uniform(k1, (n_in, 4 * n_h), jnp.float32, -bd, bd),   # cols: i,f,g,o
        whh=jax.random.uniform(k2, (n_h, 4 * n_h), jnp.float32, -bd, bd),
        b=(jax.random.uniform(k3, (4 * n_h,), jnp.float32, -bd, bd)
           + jax.random.uniform(k4, (4 * n_h,), jnp.float32, -bd, bd)),      # b_ih + b_hh
    )


def make_params(key, n_in, n_hidden, n_out):
    ks = jax.random.split(key, 7)
    dirs = dict(
        td_fw=_make_lstm_dir(ks[0], n_in, n_hidden),
        td_bw=_make_lstm_dir(ks[1], n_in, n_hidden),
        lr_fw=_make_lstm_dir(ks[2], n_in, n_hidden),
        lr_bw=_make_lstm_dir(ks[3], n_in, n_hidden),
    )
    wc = jax.random.normal(ks[4], (n_out, 4 * n_hidden), jnp.float32) * math.sqrt(
        2.0 / (4 * n_hidden))
    bn_g = jax.random.uniform(ks[5], (n_out,), jnp.float32, 0.5, 1.5)
    bn_b = jax.random.uniform(ks[6], (n_out,), jnp.float32, -0.1, 0.1)

    packed = dict(
        wih=jnp.stack([
            jnp.concatenate([dirs["td_fw"]["wih"], dirs["td_bw"]["wih"]], axis=1),
            jnp.concatenate([dirs["lr_fw"]["wih"], dirs["lr_bw"]["wih"]], axis=1),
        ]),                                                    # (2, nIn, 8*nHidden)
        bih=jnp.stack([
            jnp.concatenate([dirs["td_fw"]["b"], dirs["td_bw"]["b"]]),
            jnp.concatenate([dirs["lr_fw"]["b"], dirs["lr_bw"]["b"]]),
        ])[:, None, :],                                        # (2, 1, 8*nHidden)
        whh=jnp.stack([dirs["td_fw"]["whh"], dirs["td_bw"]["whh"],
                       dirs["lr_fw"]["whh"], dirs["lr_bw"]["whh"]]),  # (4, nH, 4*nH)
        wc=wc,                                                 # (nOut, 4*nHidden)
        bn_g=bn_g[:, None],                                    # (nOut, 1)
        bn_b=bn_b[:, None],
    )
    head = dict(wc=wc, bn_g=bn_g, bn_b=bn_b)
    return packed, dirs, head


# ----------------------------------------------------------------------------
# Pure-JAX reference (mirrors the PyTorch forward literally, incl. rot90 dance)
# ----------------------------------------------------------------------------
def _lstm_scan(x_tbi, p, n_h):
    def step(carry, x_t):
        h, c = carry
        gates = x_t @ p["wih"] + h @ p["whh"] + p["b"]
        i = jax.nn.sigmoid(gates[:, 0:n_h])
        f = jax.nn.sigmoid(gates[:, n_h:2 * n_h])
        g = jnp.tanh(gates[:, 2 * n_h:3 * n_h])
        o = jax.nn.sigmoid(gates[:, 3 * n_h:4 * n_h])
        c = f * c + i * g
        h = o * jnp.tanh(c)
        return (h, c), h

    B = x_tbi.shape[1]
    init = (jnp.zeros((B, n_h), jnp.float32), jnp.zeros((B, n_h), jnp.float32))
    _, hs = lax.scan(step, init, x_tbi)
    return hs


def _bilstm(x_tbi, p_fw, p_bw, n_h):
    out_f = _lstm_scan(x_tbi, p_fw, n_h)
    out_b = _lstm_scan(x_tbi[::-1], p_bw, n_h)[::-1]
    return jnp.concatenate([out_f, out_b], axis=-1)


def seqnet_reference(x_nchw, dirs, head, n_hidden):
    x = jnp.transpose(jnp.squeeze(x_nchw, axis=0), (1, 2, 0)).astype(jnp.float32)
    out1 = _bilstm(x, dirs["td_fw"], dirs["td_bw"], n_hidden)
    out2 = _bilstm(jnp.rot90(x, -1, axes=(0, 1)), dirs["lr_fw"], dirs["lr_bw"], n_hidden)
    out2 = jnp.rot90(out2, 1, axes=(0, 1))
    feat = jnp.concatenate([out1, out2], axis=-1)              # (H, W, 4*nHidden)
    y = jnp.einsum("hwc,oc->ohw", feat, head["wc"])            # 1x1 conv, no bias
    mean = jnp.mean(y, axis=(1, 2), keepdims=True)
    var = jnp.mean((y - mean) ** 2, axis=(1, 2), keepdims=True)
    y = (y - mean) * lax.rsqrt(var + BN_EPS)
    y = y * head["bn_g"][:, None, None] + head["bn_b"][:, None, None]
    return jnp.maximum(y, 0.0)[None]


if __name__ == "__main__":
    key = jax.random.PRNGKey(0)
    kx, kp = jax.random.split(key)
    n_in, n_hidden, n_out, hw = 16, 16, 16, 16
    # batch must be 1: SeqNet's np.squeeze + permute(1, 2, 0) assumes it
    x = jax.random.normal(kx, (1, n_in, hw, hw), jnp.float32)
    packed, dirs, head = make_params(kp, n_in, n_hidden, n_out)

    out = jax.jit(seqnet_forward)(x, packed)
    jax.block_until_ready(out)
    assert out.shape == (1, n_out, hw, hw)

    with jax.default_matmul_precision("float32"):
        ref = jax.jit(lambda xx: seqnet_reference(xx, dirs, head, n_hidden))(x)
    err = float(jnp.max(jnp.abs(out - ref)))
    assert err < 5e-2, f"kernel deviates from reference, max abs err = {err}"
    print("KERNEL_OK")
</pallas_src>

<mosaic_0001>
module attributes {stable_mosaic.version = 11 : i64} {
  func.func @_seqnet_kernel(%arg0: memref<16x16x16xf32, #tpu.memory_space<vmem>>, %arg1: memref<16x16x16xf32, #tpu.memory_space<vmem>>, %arg2: memref<2x16x128xf32, #tpu.memory_space<vmem>>, %arg3: memref<2x1x128xf32, #tpu.memory_space<vmem>>, %arg4: memref<4x16x64xf32, #tpu.memory_space<vmem>>, %arg5: memref<16x64xf32, #tpu.memory_space<vmem>>, %arg6: memref<16x1xf32, #tpu.memory_space<vmem>>, %arg7: memref<16x1xf32, #tpu.memory_space<vmem>>, %arg8: memref<256x256xf32, #tpu.memory_space<vmem>>, %arg9: memref<16x256xf32, #tpu.memory_space<vmem>>, %arg10: memref<16x16x64xf32, #tpu.memory_space<vmem>>, %arg11: memref<16x16x64xf32, #tpu.memory_space<vmem>>, %arg12: memref<16x16x64xf32, #tpu.memory_space<vmem>>, %arg13: memref<16x16x64xf32, #tpu.memory_space<vmem>>, %arg14: memref<16x16x16xf32, #tpu.memory_space<vmem>>, %arg15: memref<16x16x16xf32, #tpu.memory_space<vmem>>, %arg16: memref<16x16x16xf32, #tpu.memory_space<vmem>>, %arg17: memref<16x16x16xf32, #tpu.memory_space<vmem>>) attributes {dimension_semantics = [], scalar_prefetch = 0 : i64, scratch_operands = 8 : i64, tpu.core_type = #tpu.core_type<tc>} {
    %c0 = arith.constant 0 : index
    %c0_0 = arith.constant 0 : index
    %c0_1 = arith.constant 0 : index
    %0 = vector.load %arg0[%c0, %c0_0, %c0_1] : memref<16x16x16xf32, #tpu.memory_space<vmem>>, vector<16x16x16xf32>
    %1 = vector.shape_cast %0 : vector<16x16x16xf32> to vector<256x16xf32>
    %c0_2 = arith.constant 0 : index
    %c0_3 = arith.constant 0 : index
    %c0_4 = arith.constant 0 : index
    %2 = vector.load %arg1[%c0_2, %c0_3, %c0_4] : memref<16x16x16xf32, #tpu.memory_space<vmem>>, vector<16x16x16xf32>
    %3 = vector.shape_cast %2 : vector<16x16x16xf32> to vector<256x16xf32>
    %c0_5 = arith.constant 0 : index
    %c0_6 = arith.constant 0 : index
    %c0_7 = arith.constant 0 : index
    %4 = vector.load %arg2[%c0_5, %c0_6, %c0_7] : memref<2x16x128xf32, #tpu.memory_space<vmem>>, vector<2x16x128xf32>
    %c0_8 = arith.constant 0 : index
    %c0_9 = arith.constant 0 : index
    %c0_10 = arith.constant 0 : index
    %5 = vector.load %arg3[%c0_8, %c0_9, %c0_10] : memref<2x1x128xf32, #tpu.memory_space<vmem>>, vector<2x1x128xf32>
    %6 = vector.extract_strided_slice %4 {offsets = [0, 0, 0], sizes = [1, 16, 128], strides = [1, 1, 1]} : vector<2x16x128xf32> to vector<1x16x128xf32>
    %7 = vector.shape_cast %6 : vector<1x16x128xf32> to vector<16x128xf32>
    %cst = arith.constant dense<0.000000e+00> : vector<256x128xf32>
    %8 = tpu.matmul %1, %7, %cst {dimension_numbers = #tpu.dot_dimension_numbers<[1], [0], [0], [1], [0, 0, 1, 1], [], []>} : vector<256x16xf32>, vector<16x128xf32>, vector<256x128xf32> -> vector<256x128xf32>
    %9 = vector.extract_strided_slice %5 {offsets = [0, 0, 0], sizes = [1, 1, 128], strides = [1, 1, 1]} : vector<2x1x128xf32> to vector<1x1x128xf32>
    %10 = vector.shape_cast %9 : vector<1x1x128xf32> to vector<1x128xf32>
    %11 = vector.broadcast %10 : vector<1x128xf32> to vector<256x128xf32>
    %12 = arith.addf %8, %11 : vector<256x128xf32>
    %13 = vector.extract_strided_slice %4 {offsets = [1, 0, 0], sizes = [1, 16, 128], strides = [1, 1, 1]} : vector<2x16x128xf32> to vector<1x16x128xf32>
    %14 = vector.shape_cast %13 : vector<1x16x128xf32> to vector<16x128xf32>
    %cst_11 = arith.constant dense<0.000000e+00> : vector<256x128xf32>
    %15 = tpu.matmul %3, %14, %cst_11 {dimension_numbers = #tpu.dot_dimension_numbers<[1], [0], [0], [1], [0, 0, 1, 1], [], []>} : vector<256x16xf32>, vector<16x128xf32>, vector<256x128xf32> -> vector<256x128xf32>
    %16 = vector.extract_strided_slice %5 {offsets = [1, 0, 0], sizes = [1, 1, 128], strides = [1, 1, 1]} : vector<2x1x128xf32> to vector<1x1x128xf32>
    %17 = vector.shape_cast %16 : vector<1x1x128xf32> to vector<1x128xf32>
    %18 = vector.broadcast %17 : vector<1x128xf32> to vector<256x128xf32>
    %19 = arith.addf %15, %18 : vector<256x128xf32>
    %20 = vector.extract_strided_slice %12 {offsets = [0, 0], sizes = [256, 64], strides = [1, 1]} : vector<256x128xf32> to vector<256x64xf32>
    %21 = vector.shape_cast %20 : vector<256x64xf32> to vector<16x16x64xf32>
    %c0_12 = arith.constant 0 : index
    %c0_13 = arith.constant 0 : index
    %c0_14 = arith.constant 0 : index
    %22 = vector.load %arg10[%c0_12, %c0_13, %c0_14] : memref<16x16x64xf32, #tpu.memory_space<vmem>>, vector<16x16x64xf32>
    tpu.vector_store %arg10[%c0_12, %c0_13, %c0_14], %21 {strides = array<i32>} : memref<16x16x64xf32, #tpu.memory_space<vmem>>, vector<16x16x64xf32>,
    %23 = vector.extract_strided_slice %12 {offsets = [0, 64], sizes = [256, 64], strides = [1, 1]} : vector<256x128xf32> to vector<256x64xf32>
    %24 = vector.shape_cast %23 : vector<256x64xf32> to vector<16x16x64xf32>
    %c0_15 = arith.constant 0 : index
    %c0_16 = arith.constant 0 : index
    %c0_17 = arith.constant 0 : index
    %25 = vector.load %arg11[%c0_15, %c0_16, %c0_17] : memref<16x16x64xf32, #tpu.memory_space<vmem>>, vector<16x16x64xf32>
    tpu.vector_store %arg11[%c0_15, %c0_16, %c0_17], %24 {strides = array<i32>} : memref<16x16x64xf32, #tpu.memory_space<vmem>>, vector<16x16x64xf32>,
    %26 = vector.extract_strided_slice %19 {offsets = [0, 0], sizes = [256, 64], strides = [1, 1]} : vector<256x128xf32> to vector<256x64xf32>
    %27 = vector.shape_cast %26 : vector<256x64xf32> to vector<16x16x64xf32>
    %c0_18 = arith.constant 0 : index
    %c0_19 = arith.constant 0 : index
    %c0_20 = arith.constant 0 : index
    %28 = vector.load %arg12[%c0_18, %c0_19, %c0_20] : memref<16x16x64xf32, #tpu.memory_space<vmem>>, vector<16x16x64xf32>
    tpu.vector_store %arg12[%c0_18, %c0_19, %c0_20], %27 {strides = array<i32>} : memref<16x16x64xf32, #tpu.memory_space<vmem>>, vector<16x16x64xf32>,
    %29 = vector.extract_strided_slice %19 {offsets = [0, 64], sizes = [256, 64], strides = [1, 1]} : vector<256x128xf32> to vector<256x64xf32>
    %30 = vector.shape_cast %29 : vector<256x64xf32> to vector<16x16x64xf32>
    %c0_21 = arith.constant 0 : index
    %c0_22 = arith.constant 0 : index
    %c0_23 = arith.constant 0 : index
    %31 = vector.load %arg13[%c0_21, %c0_22, %c0_23] : memref<16x16x64xf32, #tpu.memory_space<vmem>>, vector<16x16x64xf32>
    tpu.vector_store %arg13[%c0_21, %c0_22, %c0_23], %30 {strides = array<i32>} : memref<16x16x64xf32, #tpu.memory_space<vmem>>, vector<16x16x64xf32>,
    %c0_24 = arith.constant 0 : index
    %c0_25 = arith.constant 0 : index
    %c0_26 = arith.constant 0 : index
    %32 = vector.load %arg4[%c0_24, %c0_25, %c0_26] : memref<4x16x64xf32, #tpu.memory_space<vmem>>, vector<4x16x64xf32>
    %cst_27 = arith.constant 0.000000e+00 : f32
    %33 = vector.broadcast %cst_27 : f32 to vector<16x16xf32>
    %cst_28 = arith.constant 0.000000e+00 : f32
    %34 = vector.broadcast %cst_28 : f32 to vector<16x16xf32>
    %cst_29 = arith.constant 0.000000e+00 : f32
    %35 = vector.broadcast %cst_29 : f32 to vector<16x16xf32>
    %cst_30 = arith.constant 0.000000e+00 : f32
    %36 = vector.broadcast %cst_30 : f32 to vector<16x16xf32>
    %c0_i32 = arith.constant 0 : i32
    %c16_i32 = arith.constant 16 : i32
    %37 = arith.addi %c0_i32, %c16_i32 : i32
    %c1_i32 = arith.constant 1 : i32
    %38:8 = scf.for %arg18 = %c0_i32 to %37 step %c1_i32 iter_args(%arg19 = %33, %arg20 = %34, %arg21 = %35, %arg22 = %36, %arg23 = %33, %arg24 = %34, %arg25 = %35, %arg26 = %36) -> (vector<16x16xf32>, vector<16x16xf32>, vector<16x16xf32>, vector<16x16xf32>, vector<16x16xf32>, vector<16x16xf32>, vector<16x16xf32>, vector<16x16xf32>)  : i32 {
      %c15_i32 = arith.constant 15 : i32
      %82 = arith.subi %c15_i32, %arg18 : i32
      %83 = arith.index_cast %arg18 : i32 to index
      %c0_63 = arith.constant 0 : index
      %c0_64 = arith.constant 0 : index
      %84 = vector.load %arg10[%83, %c0_63, %c0_64] : memref<16x16x64xf32, #tpu.memory_space<vmem>>, vector<1x16x64xf32>
      %85 = vector.shape_cast %84 : vector<1x16x64xf32> to vector<16x64xf32>
      %86 = vector.extract_strided_slice %32 {offsets = [0, 0, 0], sizes = [1, 16, 64], strides = [1, 1, 1]} : vector<4x16x64xf32> to vector<1x16x64xf32>
      %87 = vector.shape_cast %86 : vector<1x16x64xf32> to vector<16x64xf32>
      %cst_65 = arith.constant dense<0.000000e+00> : vector<16x64xf32>
      %88 = tpu.matmul %arg19, %87, %cst_65 {dimension_numbers = #tpu.dot_dimension_numbers<[1], [0], [0], [1], [0, 0, 1, 1], [], []>} : vector<16x16xf32>, vector<16x64xf32>, vector<16x64xf32> -> vector<16x64xf32>
      %89 = arith.addf %85, %88 : vector<16x64xf32>
      %90 = vector.extract_strided_slice %89 {offsets = [0, 0], sizes = [16, 16], strides = [1, 1]} : vector<16x64xf32> to vector<16x16xf32>
      %91 = arith.negf %90 : vector<16x16xf32>
      %92 = math.exp %91 : vector<16x16xf32>
      %cst_66 = arith.constant 1.000000e+00 : f32
      %93 = vector.broadcast %cst_66 : f32 to vector<16x16xf32>
      %94 = arith.addf %93, %92 : vector<16x16xf32>
      %95 = arith.divf %93, %94 : vector<16x16xf32>
      %96 = vector.extract_strided_slice %89 {offsets = [0, 16], sizes = [16, 16], strides = [1, 1]} : vector<16x64xf32> to vector<16x16xf32>
      %97 = arith.negf %96 : vector<16x16xf32>
      %98 = math.exp %97 : vector<16x16xf32>
      %cst_67 = arith.constant 1.000000e+00 : f32
      %99 = vector.broadcast %cst_67 : f32 to vector<16x16xf32>
      %100 = arith.addf %99, %98 : vector<16x16xf32>
      %101 = arith.divf %99, %100 : vector<16x16xf32>
      %102 = vector.extract_strided_slice %89 {offsets = [0, 32], sizes = [16, 16], strides = [1, 1]} : vector<16x64xf32> to vector<16x16xf32>
      %103 = math.tanh %102 : vector<16x16xf32>
      %104 = vector.extract_strided_slice %89 {offsets = [0, 48], sizes = [16, 16], strides = [1, 1]} : vector<16x64xf32> to vector<16x16xf32>
      %105 = arith.negf %104 : vector<16x16xf32>
      %106 = math.exp %105 : vector<16x16xf32>
      %cst_68 = arith.constant 1.000000e+00 : f32
      %107 = vector.broadcast %cst_68 : f32 to vector<16x16xf32>
      %108 = arith.addf %107, %106 : vector<16x16xf32>
      %109 = arith.divf %107, %108 : vector<16x16xf32>
      %110 = arith.mulf %101, %arg23 : vector<16x16xf32>
      %111 = arith.mulf %95, %103 : vector<16x16xf32>
      %112 = arith.addf %110, %111 : vector<16x16xf32>
      %113 = math.tanh %112 : vector<16x16xf32>
      %114 = arith.mulf %109, %113 : vector<16x16xf32>
      %115 = arith.index_cast %arg18 : i32 to index
      %c0_69 = arith.constant 0 : index
      %c0_70 = arith.constant 0 : index
      %116 = vector.load %arg14[%115, %c0_69, %c0_70] : memref<16x16x16xf32, #tpu.memory_space<vmem>>, vector<1x16x16xf32>
      %117 = vector.shape_cast %116 : vector<1x16x16xf32> to vector<16x16xf32>
      %118 = vector.shape_cast %114 : vector<16x16xf32> to vector<1x16x16xf32>
      tpu.vector_store %arg14[%115, %c0_69, %c0_70], %118 {strides = array<i32>} : memref<16x16x16xf32, #tpu.memory_space<vmem>>, vector<1x16x16xf32>,
      %119 = arith.index_cast %82 : i32 to index
      %c0_71 = arith.constant 0 : index
      %c0_72 = arith.constant 0 : index
      %120 = vector.load %arg11[%119, %c0_71, %c0_72] : memref<16x16x64xf32, #tpu.memory_space<vmem>>, vector<1x16x64xf32>
      %121 = vector.shape_cast %120 : vector<1x16x64xf32> to vector<16x64xf32>
      %122 = vector.extract_strided_slice %32 {offsets = [1, 0, 0], sizes = [1, 16, 64], strides = [1, 1, 1]} : vector<4x16x64xf32> to vector<1x16x64xf32>
      %123 = vector.shape_cast %122 : vector<1x16x64xf32> to vector<16x64xf32>
      %cst_73 = arith.constant dense<0.000000e+00> : vector<16x64xf32>
      %124 = tpu.matmul %arg20, %123, %cst_73 {dimension_numbers = #tpu.dot_dimension_numbers<[1], [0], [0], [1], [0, 0, 1, 1], [], []>} : vector<16x16xf32>, vector<16x64xf32>, vector<16x64xf32> -> vector<16x64xf32>
      %125 = arith.addf %121, %124 : vector<16x64xf32>
      %126 = vector.extract_strided_slice %125 {offsets = [0, 0], sizes = [16, 16], strides = [1, 1]} : vector<16x64xf32> to vector<16x16xf32>
      %127 = arith.negf %126 : vector<16x16xf32>
      %128 = math.exp %127 : vector<16x16xf32>
      %cst_74 = arith.constant 1.000000e+00 : f32
      %129 = vector.broadcast %cst_74 : f32 to vector<16x16xf32>
      %130 = arith.addf %129, %128 : vector<16x16xf32>
      %131 = arith.divf %129, %130 : vector<16x16xf32>
      %132 = vector.extract_strided_slice %125 {offsets = [0, 16], sizes = [16, 16], strides = [1, 1]} : vector<16x64xf32> to vector<16x16xf32>
      %133 = arith.negf %132 : vector<16x16xf32>
      %134 = math.exp %133 : vector<16x16xf32>
      %cst_75 = arith.constant 1.000000e+00 : f32
      %135 = vector.broadcast %cst_75 : f32 to vector<16x16xf32>
      %136 = arith.addf %135, %134 : vector<16x16xf32>
      %137 = arith.divf %135, %136 : vector<16x16xf32>
      %138 = vector.extract_strided_slice %125 {offsets = [0, 32], sizes = [16, 16], strides = [1, 1]} : vector<16x64xf32> to vector<16x16xf32>
      %139 = math.tanh %138 : vector<16x16xf32>
      %140 = vector.extract_strided_slice %125 {offsets = [0, 48], sizes = [16, 16], strides = [1, 1]} : vector<16x64xf32> to vector<16x16xf32>
      %141 = arith.negf %140 : vector<16x16xf32>
      %142 = math.exp %141 : vector<16x16xf32>
      %cst_76 = arith.constant 1.000000e+00 : f32
      %143 = vector.broadcast %cst_76 : f32 to vector<16x16xf32>
      %144 = arith.addf %143, %142 : vector<16x16xf32>
      %145 = arith.divf %143, %144 : vector<16x16xf32>
      %146 = arith.mulf %137, %arg24 : vector<16x16xf32>
      %147 = arith.mulf %131, %139 : vector<16x16xf32>
      %148 = arith.addf %146, %147 : vector<16x16xf32>
      %149 = math.tanh %148 : vector<16x16xf32>
      %150 = arith.mulf %145, %149 : vector<16x16xf32>
      %151 = arith.index_cast %82 : i32 to index
      %c0_77 = arith.constant 0 : index
      %c0_78 = arith.constant 0 : index
      %152 = vector.load %arg15[%151, %c0_77, %c0_78] : memref<16x16x16xf32, #tpu.memory_space<vmem>>, vector<1x16x16xf32>
      %153 = vector.shape_cast %152 : vector<1x16x16xf32> to vector<16x16xf32>
      %154 = vector.shape_cast %150 : vector<16x16xf32> to vector<1x16x16xf32>
      tpu.vector_store %arg15[%151, %c0_77, %c0_78], %154 {strides = array<i32>} : memref<16x16x16xf32, #tpu.memory_space<vmem>>, vector<1x16x16xf32>,
      %155 = arith.index_cast %arg18 : i32 to index
      %c0_79 = arith.constant 0 : index
      %c0_80 = arith.constant 0 : index
      %156 = vector.load %arg12[%155, %c0_79, %c0_80] : memref<16x16x64xf32, #tpu.memory_space<vmem>>, vector<1x16x64xf32>
      %157 = vector.shape_cast %156 : vector<1x16x64xf32> to vector<16x64xf32>
      %158 = vector.extract_strided_slice %32 {offsets = [2, 0, 0], sizes = [1, 16, 64], strides = [1, 1, 1]} : vector<4x16x64xf32> to vector<1x16x64xf32>
      %159 = vector.shape_cast %158 : vector<1x16x64xf32> to vector<16x64xf32>
      %cst_81 = arith.constant dense<0.000000e+00> : vector<16x64xf32>
      %160 = tpu.matmul %arg21, %159, %cst_81 {dimension_numbers = #tpu.dot_dimension_numbers<[1], [0], [0], [1], [0, 0, 1, 1], [], []>} : vector<16x16xf32>, vector<16x64xf32>, vector<16x64xf32> -> vector<16x64xf32>
      %161 = arith.addf %157, %160 : vector<16x64xf32>
      %162 = vector.extract_strided_slice %161 {offsets = [0, 0], sizes = [16, 16], strides = [1, 1]} : vector<16x64xf32> to vector<16x16xf32>
      %163 = arith.negf %162 : vector<16x16xf32>
      %164 = math.exp %163 : vector<16x16xf32>
      %cst_82 = arith.constant 1.000000e+00 : f32
      %165 = vector.broadcast %cst_82 : f32 to vector<16x16xf32>
      %166 = arith.addf %165, %164 : vector<16x16xf32>
      %167 = arith.divf %165, %166 : vector<16x16xf32>
      %168 = vector.extract_strided_slice %161 {offsets = [0, 16], sizes = [16, 16], strides = [1, 1]} : vector<16x64xf32> to vector<16x16xf32>
      %169 = arith.negf %168 : vector<16x16xf32>
      %170 = math.exp %169 : vector<16x16xf32>
      %cst_83 = arith.constant 1.000000e+00 : f32
      %171 = vector.broadcast %cst_83 : f32 to vector<16x16xf32>
      %172 = arith.addf %171, %170 : vector<16x16xf32>
      %173 = arith.divf %171, %172 : vector<16x16xf32>
      %174 = vector.extract_strided_slice %161 {offsets = [0, 32], sizes = [16, 16], strides = [1, 1]} : vector<16x64xf32> to vector<16x16xf32>
      %175 = math.tanh %174 : vector<16x16xf32>
      %176 = vector.extract_strided_slice %161 {offsets = [0, 48], sizes = [16, 16], strides = [1, 1]} : vector<16x64xf32> to vector<16x16xf32>
      %177 = arith.negf %176 : vector<16x16xf32>
      %178 = math.exp %177 : vector<16x16xf32>
      %cst_84 = arith.constant 1.000000e+00 : f32
      %179 = vector.broadcast %cst_84 : f32 to vector<16x16xf32>
      %180 = arith.addf %179, %178 : vector<16x16xf32>
      %181 = arith.divf %179, %180 : vector<16x16xf32>
      %182 = arith.mulf %173, %arg25 : vector<16x16xf32>
      %183 = arith.mulf %167, %175 : vector<16x16xf32>
      %184 = arith.addf %182, %183 : vector<16x16xf32>
      %185 = math.tanh %184 : vector<16x16xf32>
      %186 = arith.mulf %181, %185 : vector<16x16xf32>
      %187 = arith.index_cast %arg18 : i32 to index
      %c0_85 = arith.constant 0 : index
      %c0_86 = arith.constant 0 : index
      %188 = vector.load %arg16[%187, %c0_85, %c0_86] : memref<16x16x16xf32, #tpu.memory_space<vmem>>, vector<1x16x16xf32>
      %189 = vector.shape_cast %188 : vector<1x16x16xf32> to vector<16x16xf32>
      %190 = vector.shape_cast %186 : vector<16x16xf32> to vector<1x16x16xf32>
      tpu.vector_store %arg16[%187, %c0_85, %c0_86], %190 {strides = array<i32>} : memref<16x16x16xf32, #tpu.memory_space<vmem>>, vector<1x16x16xf32>,
      %191 = arith.index_cast %82 : i32 to index
      %c0_87 = arith.constant 0 : index
      %c0_88 = arith.constant 0 : index
      %192 = vector.load %arg13[%191, %c0_87, %c0_88] : memref<16x16x64xf32, #tpu.memory_space<vmem>>, vector<1x16x64xf32>
      %193 = vector.shape_cast %192 : vector<1x16x64xf32> to vector<16x64xf32>
      %194 = vector.extract_strided_slice %32 {offsets = [3, 0, 0], sizes = [1, 16, 64], strides = [1, 1, 1]} : vector<4x16x64xf32> to vector<1x16x64xf32>
      %195 = vector.shape_cast %194 : vector<1x16x64xf32> to vector<16x64xf32>
      %cst_89 = arith.constant dense<0.000000e+00> : vector<16x64xf32>
      %196 = tpu.matmul %arg22, %195, %cst_89 {dimension_numbers = #tpu.dot_dimension_numbers<[1], [0], [0], [1], [0, 0, 1, 1], [], []>} : vector<16x16xf32>, vector<16x64xf32>, vector<16x64xf32> -> vector<16x64xf32>
      %197 = arith.addf %193, %196 : vector<16x64xf32>
      %198 = vector.extract_strided_slice %197 {offsets = [0, 0], sizes = [16, 16], strides = [1, 1]} : vector<16x64xf32> to vector<16x16xf32>
      %199 = arith.negf %198 : vector<16x16xf32>
      %200 = math.exp %199 : vector<16x16xf32>
      %cst_90 = arith.constant 1.000000e+00 : f32
      %201 = vector.broadcast %cst_90 : f32 to vector<16x16xf32>
      %202 = arith.addf %201, %200 : vector<16x16xf32>
      %203 = arith.divf %201, %202 : vector<16x16xf32>
      %204 = vector.extract_strided_slice %197 {offsets = [0, 16], sizes = [16, 16], strides = [1, 1]} : vector<16x64xf32> to vector<16x16xf32>
      %205 = arith.negf %204 : vector<16x16xf32>
      %206 = math.exp %205 : vector<16x16xf32>
      %cst_91 = arith.constant 1.000000e+00 : f32
      %207 = vector.broadcast %cst_91 : f32 to vector<16x16xf32>
      %208 = arith.addf %207, %206 : vector<16x16xf32>
      %209 = arith.divf %207, %208 : vector<16x16xf32>
      %210 = vector.extract_strided_slice %197 {offsets = [0, 32], sizes = [16, 16], strides = [1, 1]} : vector<16x64xf32> to vector<16x16xf32>
      %211 = math.tanh %210 : vector<16x16xf32>
      %212 = vector.extract_strided_slice %197 {offsets = [0, 48], sizes = [16, 16], strides = [1, 1]} : vector<16x64xf32> to vector<16x16xf32>
      %213 = arith.negf %212 : vector<16x16xf32>
      %214 = math.exp %213 : vector<16x16xf32>
      %cst_92 = arith.constant 1.000000e+00 : f32
      %215 = vector.broadcast %cst_92 : f32 to vector<16x16xf32>
      %216 = arith.addf %215, %214 : vector<16x16xf32>
      %217 = arith.divf %215, %216 : vector<16x16xf32>
      %218 = arith.mulf %209, %arg26 : vector<16x16xf32>
      %219 = arith.mulf %203, %211 : vector<16x16xf32>
      %220 = arith.addf %218, %219 : vector<16x16xf32>
      %221 = math.tanh %220 : vector<16x16xf32>
      %222 = arith.mulf %217, %221 : vector<16x16xf32>
      %223 = arith.index_cast %82 : i32 to index
      %c0_93 = arith.constant 0 : index
      %c0_94 = arith.constant 0 : index
      %224 = vector.load %arg17[%223, %c0_93, %c0_94] : memref<16x16x16xf32, #tpu.memory_space<vmem>>, vector<1x16x16xf32>
      %225 = vector.shape_cast %224 : vector<1x16x16xf32> to vector<16x16xf32>
      %226 = vector.shape_cast %222 : vector<16x16xf32> to vector<1x16x16xf32>
      tpu.vector_store %arg17[%223, %c0_93, %c0_94], %226 {strides = array<i32>} : memref<16x16x16xf32, #tpu.memory_space<vmem>>, vector<1x16x16xf32>,
      scf.yield %114, %150, %186, %222, %112, %148, %184, %220 : vector<16x16xf32>, vector<16x16xf32>, vector<16x16xf32>, vector<16x16xf32>, vector<16x16xf32>, vector<16x16xf32>, vector<16x16xf32>, vector<16x16xf32>
    }
    %c16_i32_31 = arith.constant 16 : i32
    %c0_32 = arith.constant 0 : index
    %c0_33 = arith.constant 0 : index
    %c0_34 = arith.constant 0 : index
    %39 = vector.load %arg14[%c0_32, %c0_33, %c0_34] : memref<16x16x16xf32, #tpu.memory_space<vmem>>, vector<16x16x16xf32>
    %c0_35 = arith.constant 0 : index
    %c0_36 = arith.constant 0 : index
    %c0_37 = arith.constant 0 : index
    %40 = vector.load %arg15[%c0_35, %c0_36, %c0_37] : memref<16x16x16xf32, #tpu.memory_space<vmem>>, vector<16x16x16xf32>
    %41 = tpu.concatenate %39, %40 in 2 : vector<16x16x16xf32>, vector<16x16x16xf32> -> vector<16x16x32xf32>
    %42 = vector.shape_cast %41 : vector<16x16x32xf32> to vector<256x32xf32>
    %c0_38 = arith.constant 0 : index
    %c0_39 = arith.constant 0 : index
    %c0_40 = arith.constant 0 : index
    %43 = vector.load %arg16[%c0_38, %c0_39, %c0_40] : memref<16x16x16xf32, #tpu.memory_space<vmem>>, vector<16x16x16xf32>
    %c0_41 = arith.constant 0 : index
    %c0_42 = arith.constant 0 : index
    %c0_43 = arith.constant 0 : index
    %44 = vector.load %arg17[%c0_41, %c0_42, %c0_43] : memref<16x16x16xf32, #tpu.memory_space<vmem>>, vector<16x16x16xf32>
    %45 = tpu.concatenate %43, %44 in 2 : vector<16x16x16xf32>, vector<16x16x16xf32> -> vector<16x16x32xf32>
    %46 = vector.shape_cast %45 : vector<16x16x32xf32> to vector<256x32xf32>
    %c0_44 = arith.constant 0 : index
    %c0_45 = arith.constant 0 : index
    %47 = vector.load %arg5[%c0_44, %c0_45] : memref<16x64xf32, #tpu.memory_space<vmem>>, vector<16x64xf32>
    %48 = vector.extract_strided_slice %47 {offsets = [0, 0], sizes = [16, 32], strides = [1, 1]} : vector<16x64xf32> to vector<16x32xf32>
    %cst_46 = arith.constant dense<0.000000e+00> : vector<16x256xf32>
    %49 = tpu.matmul %48, %42, %cst_46 {dimension_numbers = #tpu.dot_dimension_numbers<[1], [1], [0], [0], [0, 0, 1, 0], [], []>} : vector<16x32xf32>, vector<256x32xf32>, vector<16x256xf32> -> vector<16x256xf32>
    %50 = vector.extract_strided_slice %47 {offsets = [0, 32], sizes = [16, 32], strides = [1, 1]} : vector<16x64xf32> to vector<16x32xf32>
    %cst_47 = arith.constant dense<0.000000e+00> : vector<16x256xf32>
    %51 = tpu.matmul %50, %46, %cst_47 {dimension_numbers = #tpu.dot_dimension_numbers<[1], [1], [0], [0], [0, 0, 1, 0], [], []>} : vector<16x32xf32>, vector<256x32xf32>, vector<16x256xf32> -> vector<16x256xf32>
    %c0_48 = arith.constant 0 : index
    %c0_49 = arith.constant 0 : index
    %52 = vector.load %arg8[%c0_48, %c0_49] : memref<256x256xf32, #tpu.memory_space<vmem>>, vector<256x256xf32>
    %cst_50 = arith.constant dense<0.000000e+00> : vector<16x256xf32>
    %53 = tpu.matmul %51, %52, %cst_50 {dimension_numbers = #tpu.dot_dimension_numbers<[1], [0], [0], [1], [0, 0, 1, 1], [], []>} : vector<16x256xf32>, vector<256x256xf32>, vector<16x256xf32> -> vector<16x256xf32>
    %54 = arith.addf %49, %53 : vector<16x256xf32>
    %cst_51 = arith.constant dense<0.000000e+00> : vector<16xf32>
    %55 = vector.multi_reduction <add>, %54, %cst_51 [1] : vector<16x256xf32> to vector<16xf32>
    %56 = vector.shape_cast %55 : vector<16xf32> to vector<16x1xf32>
    %cst_52 = arith.constant 2.560000e+02 : f32
    %57 = vector.broadcast %cst_52 : f32 to vector<16x1xf32>
    %58 = arith.divf %56, %57 : vector<16x1xf32>
    %59 = vector.broadcast %58 : vector<16x1xf32> to vector<16x256xf32>
    %60 = arith.subf %54, %59 : vector<16x256xf32>
    %61 = arith.mulf %60, %60 : vector<16x256xf32>
    %cst_53 = arith.constant dense<0.000000e+00> : vector<16xf32>
    %62 = vector.multi_reduction <add>, %61, %cst_53 [1] : vector<16x256xf32> to vector<16xf32>
    %63 = vector.shape_cast %62 : vector<16xf32> to vector<16x1xf32>
    %cst_54 = arith.constant 2.560000e+02 : f32
    %64 = vector.broadcast %cst_54 : f32 to vector<16x1xf32>
    %65 = arith.divf %63, %64 : vector<16x1xf32>
    %66 = vector.broadcast %58 : vector<16x1xf32> to vector<16x256xf32>
    %67 = arith.subf %54, %66 : vector<16x256xf32>
    %cst_55 = arith.constant 9.99999974E-6 : f32
    %68 = vector.broadcast %cst_55 : f32 to vector<16x1xf32>
    %69 = arith.addf %65, %68 : vector<16x1xf32>
    %70 = math.rsqrt %69 : vector<16x1xf32>
    %71 = vector.broadcast %70 : vector<16x1xf32> to vector<16x256xf32>
    %72 = arith.mulf %67, %71 : vector<16x256xf32>
    %c0_56 = arith.constant 0 : index
    %c0_57 = arith.constant 0 : index
    %73 = vector.load %arg6[%c0_56, %c0_57] : memref<16x1xf32, #tpu.memory_space<vmem>>, vector<16x1xf32>
    %74 = vector.broadcast %73 : vector<16x1xf32> to vector<16x256xf32>
    %75 = arith.mulf %72, %74 : vector<16x256xf32>
    %c0_58 = arith.constant 0 : index
    %c0_59 = arith.constant 0 : index
    %76 = vector.load %arg7[%c0_58, %c0_59] : memref<16x1xf32, #tpu.memory_space<vmem>>, vector<16x1xf32>
    %77 = vector.broadcast %76 : vector<16x1xf32> to vector<16x256xf32>
    %78 = arith.addf %75, %77 : vector<16x256xf32>
    %cst_60 = arith.constant 0.000000e+00 : f32
    %79 = vector.broadcast %cst_60 : f32 to vector<16x256xf32>
    %80 = arith.maximumf %78, %79 : vector<16x256xf32>
    %c0_61 = arith.constant 0 : index
    %c0_62 = arith.constant 0 : index
    %81 = vector.load %arg9[%c0_61, %c0_62] : memref<16x256xf32, #tpu.memory_space<vmem>>, vector<16x256xf32>
    tpu.vector_store %arg9[%c0_61, %c0_62], %80 {strides = array<i32>} : memref<16x256xf32, #tpu.memory_space<vmem>>, vector<16x256xf32>,
    return
  }
}

</mosaic_0001>

<llo_original>
// kernel: seqnet_forward.1
$region0: #{seqnet_forward.1}
  #allocation0 [shape = 'u32[]', space=smem, size = 0x4, offset = 0x4, fixed_abs, tag = 'smem constant byte address 0x4 - core index']
  #allocation1 [shape = 'u32[144,128]{1,0:T(1,128)}', space=vmem, size = 0x12000, scoped, tag = 'internal scratch']
  #allocation2 [shape = 'f32[16,16,64]{2,1,0:T(8,128)}', space=vmem, size = 0x20000, scoped, tag = 'scratch operand']
  #allocation3 [shape = 'f32[16,16,64]{2,1,0:T(8,128)}', space=vmem, size = 0x20000, scoped, tag = 'scratch operand']
  #allocation4 [shape = 'f32[16,16,64]{2,1,0:T(8,128)}', space=vmem, size = 0x20000, scoped, tag = 'scratch operand']
  #allocation5 [shape = 'f32[16,16,64]{2,1,0:T(8,128)}', space=vmem, size = 0x20000, scoped, tag = 'scratch operand']
  #allocation6 [shape = 'f32[16,16,16]{2,1,0:T(8,128)}', space=vmem, size = 0x20000, scoped, tag = 'scratch operand']
  #allocation7 [shape = 'f32[16,16,16]{2,1,0:T(8,128)}', space=vmem, size = 0x20000, scoped, tag = 'scratch operand']
  #allocation8 [shape = 'f32[16,16,16]{2,1,0:T(8,128)}', space=vmem, size = 0x20000, scoped, tag = 'scratch operand']
  #allocation9 [shape = 'f32[16,16,16]{2,1,0:T(8,128)}', space=vmem, size = 0x20000, scoped, tag = 'scratch operand']
  %s0 = inlined_call_operand.vmem [shape: f32[16,16,16], index: 0, kind: input, shape index: {}]
  %s1 = inlined_call_operand.vmem [shape: f32[16,16,16], index: 1, kind: input, shape index: {}]
  %s2 = inlined_call_operand.vmem [shape: f32[2,16,128], index: 2, kind: input, shape index: {}]
  %s3 = inlined_call_operand.vmem [shape: f32[2,1,128], index: 3, kind: input, shape index: {}]
  %s4 = inlined_call_operand.vmem [shape: f32[4,16,64], index: 4, kind: input, shape index: {}]
  %s5 = inlined_call_operand.vmem [shape: f32[16,64], index: 5, kind: input, shape index: {}]
  %s6 = inlined_call_operand.vmem [shape: f32[16,1], index: 6, kind: input, shape index: {}]
  %s7 = inlined_call_operand.vmem [shape: f32[16,1], index: 7, kind: input, shape index: {}]
  %s8 = inlined_call_operand.vmem [shape: f32[256,256], index: 8, kind: input, shape index: {}]
  %s9 = inlined_call_operand.vmem [shape: f32[16,256], index: 9, kind: output, shape index: {}]
  %s10 = sld [smem:[#allocation0]]
  $region53: #{seqnet_forward.1} parent=0
    _
  %s12 = ssub.s32 1, %s10
  %s13 = scalar_select 0, %s12, %s10
  // Predicated region
  $region2: #{seqnet_forward.1} parent=0 // pred_check
    _
  $region3: #{seqnet_forward.1} parent=0 // pred_check_branch
    %15 = sbr.rel (0) target = $region5
  $region4: #{seqnet_forward.1} parent=0 // pred_region
    _
  $region5: #{seqnet_forward.1} parent=0 // pred_fallthru
    _
  // Predicated region
  $region6: #{seqnet_forward.1} parent=0 // pred_check
    _
  $region7: #{seqnet_forward.1} parent=0 // pred_check_branch
    %17 = sbr.rel (0) target = $region9
  $region8: #{seqnet_forward.1} parent=0 // pred_region
    _
  $region9: #{seqnet_forward.1} parent=0 // pred_fallthru
    _
  // Predicated region
  $region10: #{seqnet_forward.1} parent=0 // pred_check
    _
  $region11: #{seqnet_forward.1} parent=0 // pred_check_branch
    %19 = sbr.rel (0) target = $region13
  $region12: #{seqnet_forward.1} parent=0 // pred_region
    _
  $region13: #{seqnet_forward.1} parent=0 // pred_fallthru
    _
  // Predicated region
  $region14: #{seqnet_forward.1} parent=0 // pred_check
    _
  $region15: #{seqnet_forward.1} parent=0 // pred_check_branch
    %21 = sbr.rel (0) target = $region17
  $region16: #{seqnet_forward.1} parent=0 // pred_region
    _
  $region17: #{seqnet_forward.1} parent=0 // pred_fallthru
    _
  // Predicated region
  $region18: #{seqnet_forward.1} parent=0 // pred_check
    _
  $region19: #{seqnet_forward.1} parent=0 // pred_check_branch
    %23 = sbr.rel (0) target = $region21
  $region20: #{seqnet_forward.1} parent=0 // pred_region
    _
  $region21: #{seqnet_forward.1} parent=0 // pred_fallthru
    _
  // Predicated region
  $region22: #{seqnet_forward.1} parent=0 // pred_check
    _
  $region23: #{seqnet_forward.1} parent=0 // pred_check_branch
    %25 = sbr.rel (0) target = $region25
  $region24: #{seqnet_forward.1} parent=0 // pred_region
    _
  $region25: #{seqnet_forward.1} parent=0 // pred_fallthru
    _
  // Predicated region
  $region26: #{seqnet_forward.1} parent=0 // pred_check
    _
  $region27: #{seqnet_forward.1} parent=0 // pred_check_branch
    %27 = sbr.rel (0) target = $region29
  $region28: #{seqnet_forward.1} parent=0 // pred_region
    _
  $region29: #{seqnet_forward.1} parent=0 // pred_fallthru
    _
  // Predicated region
  $region30: #{seqnet_forward.1} parent=0 // pred_check
    _
  $region31: #{seqnet_forward.1} parent=0 // pred_check_branch
    %29 = sbr.rel (0) target = $region33
  $region32: #{seqnet_forward.1} parent=0 // pred_region
    _
  $region33: #{seqnet_forward.1} parent=0 // pred_fallthru
    _
  // Predicated region
  $region34: #{seqnet_forward.1} parent=0 // pred_check
    _
  $region35: #{seqnet_forward.1} parent=0 // pred_check_branch
    %31 = sbr.rel (0) target = $region37
  $region36: #{seqnet_forward.1} parent=0 // pred_region
    _
  $region37: #{seqnet_forward.1} parent=0 // pred_fallthru
    _
  %v32 = vld [vmem:[%s0] sm:$0xff]
  %v33 = vld [vmem:[%s0 + $0x8] sm:$0xff]
  %v34 = vld [vmem:[%s0 + $0x10] sm:$0xff]
  %v35 = vld [vmem:[%s0 + $0x18] sm:$0xff]
  %v36 = vld [vmem:[%s0 + $0x20] sm:$0xff]
  %v37 = vld [vmem:[%s0 + $0x28] sm:$0xff]
  %v38 = vld [vmem:[%s0 + $0x30] sm:$0xff]
  %v39 = vld [vmem:[%s0 + $0x38] sm:$0xff]
  %v40 = vld [vmem:[%s0 + $0x40] sm:$0xff]
  %v41 = vld [vmem:[%s0 + $0x48] sm:$0xff]
  %v42 = vld [vmem:[%s0 + $0x50] sm:$0xff]
  %v43 = vld [vmem:[%s0 + $0x58] sm:$0xff]
  %v44 = vld [vmem:[%s0 + $0x60] sm:$0xff]
  %v45 = vld [vmem:[%s0 + $0x68] sm:$0xff]
  %v46 = vld [vmem:[%s0 + $0x70] sm:$0xff]
  %v47 = vld [vmem:[%s0 + $0x78] sm:$0xff]
  %v48 = vld [vmem:[%s0 + $0x80] sm:$0xff]
  %v49 = vld [vmem:[%s0 + $0x88] sm:$0xff]
  %v50 = vld [vmem:[%s0 + $0x90] sm:$0xff]
  %v51 = vld [vmem:[%s0 + $0x98] sm:$0xff]
  %v52 = vld [vmem:[%s0 + $0xa0] sm:$0xff]
  %v53 = vld [vmem:[%s0 + $0xa8] sm:$0xff]
  %v54 = vld [vmem:[%s0 + $0xb0] sm:$0xff]
  %v55 = vld [vmem:[%s0 + $0xb8] sm:$0xff]
  %v56 = vld [vmem:[%s0 + $0xc0] sm:$0xff]
  %v57 = vld [vmem:[%s0 + $0xc8] sm:$0xff]
  %v58 = vld [vmem:[%s0 + $0xd0] sm:$0xff]
  %v59 = vld [vmem:[%s0 + $0xd8] sm:$0xff]
  %v60 = vld [vmem:[%s0 + $0xe0] sm:$0xff]
  %v61 = vld [vmem:[%s0 + $0xe8] sm:$0xff]
  %v62 = vld [vmem:[%s0 + $0xf0] sm:$0xff]
  %v63 = vld [vmem:[%s0 + $0xf8] sm:$0xff]
  %v64 = vld [vmem:[%s1] sm:$0xff]
  %v65 = vld [vmem:[%s1 + $0x8] sm:$0xff]
  %v66 = vld [vmem:[%s1 + $0x10] sm:$0xff]
  %v67 = vld [vmem:[%s1 + $0x18] sm:$0xff]
  %v68 = vld [vmem:[%s1 + $0x20] sm:$0xff]
  %v69 = vld [vmem:[%s1 + $0x28] sm:$0xff]
  %v70 = vld [vmem:[%s1 + $0x30] sm:$0xff]
  %v71 = vld [vmem:[%s1 + $0x38] sm:$0xff]
  %v72 = vld [vmem:[%s1 + $0x40] sm:$0xff]
  %v73 = vld [vmem:[%s1 + $0x48] sm:$0xff]
  %v74 = vld [vmem:[%s1 + $0x50] sm:$0xff]
  %v75 = vld [vmem:[%s1 + $0x58] sm:$0xff]
  %v76 = vld [vmem:[%s1 + $0x60] sm:$0xff]
  %v77 = vld [vmem:[%s1 + $0x68] sm:$0xff]
  %v78 = vld [vmem:[%s1 + $0x70] sm:$0xff]
  %v79 = vld [vmem:[%s1 + $0x78] sm:$0xff]
  %v80 = vld [vmem:[%s1 + $0x80] sm:$0xff]
  %v81 = vld [vmem:[%s1 + $0x88] sm:$0xff]
  %v82 = vld [vmem:[%s1 + $0x90] sm:$0xff]
  %v83 = vld [vmem:[%s1 + $0x98] sm:$0xff]
  %v84 = vld [vmem:[%s1 + $0xa0] sm:$0xff]
  %v85 = vld [vmem:[%s1 + $0xa8] sm:$0xff]
  %v86 = vld [vmem:[%s1 + $0xb0] sm:$0xff]
  %v87 = vld [vmem:[%s1 + $0xb8] sm:$0xff]
  %v88 = vld [vmem:[%s1 + $0xc0] sm:$0xff]
  %v89 = vld [vmem:[%s1 + $0xc8] sm:$0xff]
  %v90 = vld [vmem:[%s1 + $0xd0] sm:$0xff]
  %v91 = vld [vmem:[%s1 + $0xd8] sm:$0xff]
  %v92 = vld [vmem:[%s1 + $0xe0] sm:$0xff]
  %v93 = vld [vmem:[%s1 + $0xe8] sm:$0xff]
  %v94 = vld [vmem:[%s1 + $0xf0] sm:$0xff]
  %v95 = vld [vmem:[%s1 + $0xf8] sm:$0xff]
  %v96 = vld [vmem:[%s2] sm:$0xff]
  %v97 = vld [vmem:[%s2 + $0x8] sm:$0xff]
  %v98 = vld [vmem:[%s2 + $0x10] sm:$0xff]
  %v99 = vld [vmem:[%s2 + $0x18] sm:$0xff]
  %v100 = vld [vmem:[%s3] sm:$0x1]
  %v101 = vld [vmem:[%s3 + $0x1] sm:$0x1]
  %v103 = vlaneseq
  %v104 = vshrl.u32 %v103, 7
  %v105 = vsub.s32 0, %v104
  %v106 = vrot.slane %v100, %v105
  %vm108 = vcmask 130048
  %v110 = vsel %vm108, %v32, 0
  %v113 = vsel %vm108, %v33, 0
  %v116 = vsel %vm108, %v34, 0
  %v119 = vsel %vm108, %v35, 0
  %v122 = vsel %vm108, %v36, 0
  %v125 = vsel %vm108, %v37, 0
  %v128 = vsel %vm108, %v38, 0
  %v131 = vsel %vm108, %v39, 0
  %v134 = vsel %vm108, %v40, 0
  %v137 = vsel %vm108, %v41, 0
  %v140 = vsel %vm108, %v42, 0
  %v143 = vsel %vm108, %v43, 0
  %v146 = vsel %vm108, %v44, 0
  %v149 = vsel %vm108, %v45, 0
  %v152 = vsel %vm108, %v46, 0
  %v155 = vsel %vm108, %v47, 0
  %v158 = vsel %vm108, %v48, 0
  %v161 = vsel %vm108, %v49, 0
  %v164 = vsel %vm108, %v50, 0
  %v167 = vsel %vm108, %v51, 0
  %v170 = vsel %vm108, %v52, 0
  %v173 = vsel %vm108, %v53, 0
  %v176 = vsel %vm108, %v54, 0
  %v179 = vsel %vm108, %v55, 0
  %v182 = vsel %vm108, %v56, 0
  %v185 = vsel %vm108, %v57, 0
  %v188 = vsel %vm108, %v58, 0
  %v191 = vsel %vm108, %v59, 0
  %v194 = vsel %vm108, %v60, 0
  %v197 = vsel %vm108, %v61, 0
  %v200 = vsel %vm108, %v62, 0
  %v203 = vsel %vm108, %v63, 0
  %205 = vmatprep.subr.mxu0 0.0
  %206 = vmatpush1.msra.mxu0 0.0
  %207 = vmatprep.subr.mxu0 0.0
  %208 = vmatpush1.msra.mxu0 0.0
  %209 = vmatprep.subr.mxu0 0.0
  %210 = vmatpush1.msra.mxu0 0.0
  %211 = vmatprep.subr.mxu0 0.0
  %212 = vmatpush1.msra.mxu0 0.0
  %213 = vmatprep.subr.mxu0 0.0
  %214 = vmatpush1.msra.mxu0 0.0
  %215 = vmatprep.subr.mxu0 0.0
  %216 = vmatpush1.msra.mxu0 0.0
  %217 = vmatprep.subr.mxu0 0.0
  %218 = vmatpush1.msra.mxu0 0.0
  %219 = vmatprep.subr.mxu0 0.0
  %220 = vmatpush1.msra.mxu0 0.0
  %221 = vmatprep.subr.mxu0 0.0
  %222 = vmatpush1.msra.mxu0 0.0
  %223 = vmatprep.subr.mxu0 0.0
  %224 = vmatpush1.msra.mxu0 0.0
  %225 = vmatprep.subr.mxu0 0.0
  %226 = vmatpush1.msra.mxu0 0.0
  %227 = vmatprep.subr.mxu0 0.0
  %228 = vmatpush1.msra.mxu0 0.0
  %229 = vmatprep.subr.mxu0 0.0
  %230 = vmatpush1.msra.mxu0 0.0
  %231 = vmatprep.subr.mxu0 0.0
  %232 = vmatpush1.msra.mxu0 0.0
  %233 = vmatprep.subr.mxu0 0.0
  %234 = vmatpush1.msra.mxu0 %v97
  %235 = vmatprep.subr.mxu0 0.0
  %236 = vmatpush1.msra.mxu0 %v96
  %237 = vmatprep.subr.mxu0 0.0
  %238 = vmatpush2.msra.mxu0 0.0
  %239 = vmatprep.subr.mxu0 0.0
  %240 = vmatpush2.msra.mxu0 0.0
  %241 = vmatprep.subr.mxu0 0.0
  %242 = vmatpush2.msra.mxu0 0.0
  %243 = vmatprep.subr.mxu0 0.0
  %244 = vmatpush2.msra.mxu0 0.0
  %245 = vmatprep.subr.mxu0 0.0
  %246 = vmatpush2.msra.mxu0 0.0
  %247 = vmatprep.subr.mxu0 0.0
  %248 = vmatpush2.msra.mxu0 0.0
  %249 = vmatprep.subr.mxu0 0.0
  %250 = vmatpush2.msra.mxu0 0.0
  %251 = vmatprep.subr.mxu0 0.0
  %252 = vmatpush2.msra.mxu0 0.0
  %253 = vmatprep.subr.mxu0 0.0
  %254 = vmatpush2.msra.mxu0 0.0
  %255 = vmatprep.subr.mxu0 0.0
  %256 = vmatpush2.msra.mxu0 0.0
  %257 = vmatprep.subr.mxu0 0.0
  %258 = vmatpush2.msra.mxu0 0.0
  %259 = vmatprep.subr.mxu0 0.0
  %260 = vmatpush2.msra.mxu0 0.0
  %261 = vmatprep.subr.mxu0 0.0
  %262 = vmatpush2.msra.mxu0 0.0
  %263 = vmatprep.subr.mxu0 0.0
  %264 = vmatpush2.msra.mxu0 0.0
  %265 = vmatprep.subr.mxu0 0.0
  %266 = vmatpush2.msra.mxu0 0.0
  %267 = vmatprep.subr.mxu0 0.0
  %268 = vmatpush2.msra.mxu0 0.0
  %269 = vmatprep.mubr.f32.mxu0 0.0
  %270 = vmatmul.mubr.f32.gmra.mxu0 %v110
  %v271 = vpop.f32.mrf.mxu0
  %v272 = vadd.f32 %v106, %v271
  %v273 = vpop.f32.mrf.mxu0
  %274 = vmatprep.mubr.f32.mxu0 0.0
  %275 = vmatmul.mubr.f32.gmra.mxu0 %v113
  %v276 = vpop.f32.mrf.mxu0
  %v277 = vadd.f32 %v106, %v276
  %v278 = vpop.f32.mrf.mxu0
  %279 = vmatprep.mubr.f32.mxu0 0.0
  %280 = vmatmul.mubr.f32.gmra.mxu0 %v116
  %v281 = vpop.f32.mrf.mxu0
  %v282 = vadd.f32 %v106, %v281
  %v283 = vpop.f32.mrf.mxu0
  %284 = vmatprep.mubr.f32.mxu0 0.0
  %285 = vmatmul.mubr.f32.gmra.mxu0 %v119
  %v286 = vpop.f32.mrf.mxu0
  %v287 = vadd.f32 %v106, %v286
  %v288 = vpop.f32.mrf.mxu0
  %289 = vmatprep.mubr.f32.mxu0 0.0
  %290 = vmatmul.mubr.f32.gmra.mxu0 %v122
  %v291 = vpop.f32.mrf.mxu0
  %v292 = vadd.f32 %v106, %v291
  %v293 = vpop.f32.mrf.mxu0
  %294 = vmatprep.mubr.f32.mxu0 0.0
  %295 = vmatmul.mubr.f32.gmra.mxu0 %v125
  %v296 = vpop.f32.mrf.mxu0
  %v297 = vadd.f32 %v106, %v296
  %v298 = vpop.f32.mrf.mxu0
  %299 = vmatprep.mubr.f32.mxu0 0.0
  %300 = vmatmul.mubr.f32.gmra.mxu0 %v128
  %v301 = vpop.f32.mrf.mxu0
  %v302 = vadd.f32 %v106, %v301
  %v303 = vpop.f32.mrf.mxu0
  %304 = vmatprep.mubr.f32.mxu0 0.0
  %305 = vmatmul.mubr.f32.gmra.mxu0 %v131
  %v306 = vpop.f32.mrf.mxu0
  %v307 = vadd.f32 %v106, %v306
  %v308 = vpop.f32.mrf.mxu0
  %309 = vmatprep.mubr.f32.mxu0 0.0
  %310 = vmatmul.mubr.f32.gmra.mxu0 %v134
  %v311 = vpop.f32.mrf.mxu0
  %v312 = vadd.f32 %v106, %v311
  %v313 = vpop.f32.mrf.mxu0
  %314 = vmatprep.mubr.f32.mxu0 0.0
  %315 = vmatmul.mubr.f32.gmra.mxu0 %v137
  %v316 = vpop.f32.mrf.mxu0
  %v317 = vadd.f32 %v106, %v316
  %v318 = vpop.f32.mrf.mxu0
  %319 = vmatprep.mubr.f32.mxu0 0.0
  %320 = vmatmul.mubr.f32.gmra.mxu0 %v140
  %v321 = vpop.f32.mrf.mxu0
  %v322 = vadd.f32 %v106, %v321
  %v323 = vpop.f32.mrf.mxu0
  %324 = vmatprep.mubr.f32.mxu0 0.0
  %325 = vmatmul.mubr.f32.gmra.mxu0 %v143
  %v326 = vpop.f32.mrf.mxu0
  %v327 = vadd.f32 %v106, %v326
  %v328 = vpop.f32.mrf.mxu0
  %329 = vmatprep.mubr.f32.mxu0 0.0
  %330 = vmatmul.mubr.f32.gmra.mxu0 %v146
  %v331 = vpop.f32.mrf.mxu0
  %v332 = vadd.f32 %v106, %v331
  %v333 = vpop.f32.mrf.mxu0
  %334 = vmatprep.mubr.f32.mxu0 0.0
  %335 = vmatmul.mubr.f32.gmra.mxu0 %v149
  %v336 = vpop.f32.mrf.mxu0
  %v337 = vadd.f32 %v106, %v336
  %v338 = vpop.f32.mrf.mxu0
  %339 = vmatprep.mubr.f32.mxu0 0.0
  %340 = vmatmul.mubr.f32.gmra.mxu0 %v152
  %v341 = vpop.f32.mrf.mxu0
  %v342 = vadd.f32 %v106, %v341
  %v343 = vpop.f32.mrf.mxu0
  %344 = vmatprep.mubr.f32.mxu0 0.0
  %345 = vmatmul.mubr.f32.gmra.mxu0 %v155
  %v346 = vpop.f32.mrf.mxu0
  %v347 = vadd.f32 %v106, %v346
  %v348 = vpop.f32.mrf.mxu0
  %349 = vmatprep.mubr.f32.mxu0 0.0
  %350 = vmatmul.mubr.f32.gmra.mxu0 %v158
  %v351 = vpop.f32.mrf.mxu0
  %v352 = vadd.f32 %v106, %v351
  %v353 = vpop.f32.mrf.mxu0
  %354 = vmatprep.mubr.f32.mxu0 0.0
  %355 = vmatmul.mubr.f32.gmra.mxu0 %v161
  %v356 = vpop.f32.mrf.mxu0
  %v357 = vadd.f32 %v106, %v356
  %v358 = vpop.f32.mrf.mxu0
  %359 = vmatprep.mubr.f32.mxu0 0.0
  %360 = vmatmul.mubr.f32.gmra.mxu0 %v164
  %v361 = vpop.f32.mrf.mxu0
  %v362 = vadd.f32 %v106, %v361
  %v363 = vpop.f32.mrf.mxu0
  %364 = vmatprep.mubr.f32.mxu0 0.0
  %365 = vmatmul.mubr.f32.gmra.mxu0 %v167
  %v366 = vpop.f32.mrf.mxu0
  %v367 = vadd.f32 %v106, %v366
  %v368 = vpop.f32.mrf.mxu0
  %369 = vmatprep.mubr.f32.mxu0 0.0
  %370 = vmatmul.mubr.f32.gmra.mxu0 %v170
  %v371 = vpop.f32.mrf.mxu0
  %v372 = vadd.f32 %v106, %v371
  %v373 = vpop.f32.mrf.mxu0
  %374 = vmatprep.mubr.f32.mxu0 0.0
  %375 = vmatmul.mubr.f32.gmra.mxu0 %v173
  %v376 = vpop.f32.mrf.mxu0
  %v377 = vadd.f32 %v106, %v376
  %v378 = vpop.f32.mrf.mxu0
  %379 = vmatprep.mubr.f32.mxu0 0.0
  %380 = vmatmul.mubr.f32.gmra.mxu0 %v176
  %v381 = vpop.f32.mrf.mxu0
  %v382 = vadd.f32 %v106, %v381
  %v383 = vpop.f32.mrf.mxu0
  %384 = vmatprep.mubr.f32.mxu0 0.0
  %385 = vmatmul.mubr.f32.gmra.mxu0 %v179
  %v386 = vpop.f32.mrf.mxu0
  %v387 = vadd.f32 %v106, %v386
  %v388 = vpop.f32.mrf.mxu0
  %389 = vmatprep.mubr.f32.mxu0 0.0
  %390 = vmatmul.mubr.f32.gmra.mxu0 %v182
  %v391 = vpop.f32.mrf.mxu0
  %v392 = vadd.f32 %v106, %v391
  %v393 = vpop.f32.mrf.mxu0
  %394 = vmatprep.mubr.f32.mxu0 0.0
  %395 = vmatmul.mubr.f32.gmra.mxu0 %v185
  %v396 = vpop.f32.mrf.mxu0
  %v397 = vadd.f32 %v106, %v396
  %v398 = vpop.f32.mrf.mxu0
  %399 = vmatprep.mubr.f32.mxu0 0.0
  %400 = vmatmul.mubr.f32.gmra.mxu0 %v188
  %v401 = vpop.f32.mrf.mxu0
  %v402 = vadd.f32 %v106, %v401
  %v403 = vpop.f32.mrf.mxu0
  %404 = vmatprep.mubr.f32.mxu0 0.0
  %405 = vmatmul.mubr.f32.gmra.mxu0 %v191
  %v406 = vpop.f32.mrf.mxu0
  %v407 = vadd.f32 %v106, %v406
  %v408 = vpop.f32.mrf.mxu0
  %409 = vmatprep.mubr.f32.mxu0 0.0
  %410 = vmatmul.mubr.f32.gmra.mxu0 %v194
  %v411 = vpop.f32.mrf.mxu0
  %v412 = vadd.f32 %v106, %v411
  %v413 = vpop.f32.mrf.mxu0
  %414 = vmatprep.mubr.f32.mxu0 0.0
  %415 = vmatmul.mubr.f32.gmra.mxu0 %v197
  %v416 = vpop.f32.mrf.mxu0
  %v417 = vadd.f32 %v106, %v416
  %v418 = vpop.f32.mrf.mxu0
  %419 = vmatprep.mubr.f32.mxu0 0.0
  %420 = vmatmul.mubr.f32.gmra.mxu0 %v200
  %v421 = vpop.f32.mrf.mxu0
  %v422 = vadd.f32 %v106, %v421
  %v423 = vpop.f32.mrf.mxu0
  %424 = vmatprep.mubr.f32.mxu0 0.0
  %425 = vmatmul.mubr.f32.gmra.mxu0 %v203
  %v426 = vpop.f32.mrf.mxu0
  %v427 = vadd.f32 %v106, %v426
  %v428 = vpop.f32.mrf.mxu0
  %429 = vdwg.mxu0
  %v431 = vlaneseq
  %v432 = vshrl.u32 %v431, 7
  %v433 = vsub.s32 0, %v432
  %v434 = vrot.slane %v101, %v433
  %v437 = vsel %vm108, %v64, 0
  %v440 = vsel %vm108, %v65, 0
  %v443 = vsel %vm108, %v66, 0
  %v446 = vsel %vm108, %v67, 0
  %v449 = vsel %vm108, %v68, 0
  %v452 = vsel %vm108, %v69, 0
  %v455 = vsel %vm108, %v70, 0
  %v458 = vsel %vm108, %v71, 0
  %v461 = vsel %vm108, %v72, 0
  %v464 = vsel %vm108, %v73, 0
  %v467 = vsel %vm108, %v74, 0
  %v470 = vsel %vm108, %v75, 0
  %v473 = vsel %vm108, %v76, 0
  %v476 = vsel %vm108, %v77, 0
  %v479 = vsel %vm108, %v78, 0
  %v482 = vsel %vm108, %v79, 0
  %v485 = vsel %vm108, %v80, 0
  %v488 = vsel %vm108, %v81, 0
  %v491 = vsel %vm108, %v82, 0
  %v494 = vsel %vm108, %v83, 0
  %v497 = vsel %vm108, %v84, 0
  %v500 = vsel %vm108, %v85, 0
  %v503 = vsel %vm108, %v86, 0
  %v506 = vsel %vm108, %v87, 0
  %v509 = vsel %vm108, %v88, 0
  %v512 = vsel %vm108, %v89, 0
  %v515 = vsel %vm108, %v90, 0
  %v518 = vsel %vm108, %v91, 0
  %v521 = vsel %vm108, %v92, 0
  %v524 = vsel %vm108, %v93, 0
  %v527 = vsel %vm108, %v94, 0
  %v530 = vsel %vm108, %v95, 0
  %532 = vmatprep.subr.mxu0 0.0
  %533 = vmatpush1.msra.mxu0 0.0
  %534 = vmatprep.subr.mxu0 0.0
  %535 = vmatpush1.msra.mxu0 0.0
  %536 = vmatprep.subr.mxu0 0.0
  %537 = vmatpush1.msra.mxu0 0.0
  %538 = vmatprep.subr.mxu0 0.0
  %539 = vmatpush1.msra.mxu0 0.0
  %540 = vmatprep.subr.mxu0 0.0
  %541 = vmatpush1.msra.mxu0 0.0
  %542 = vmatprep.subr.mxu0 0.0
  %543 = vmatpush1.msra.mxu0 0.0
  %544 = vmatprep.subr.mxu0 0.0
  %545 = vmatpush1.msra.mxu0 0.0
  %546 = vmatprep.subr.mxu0 0.0
  %547 = vmatpush1.msra.mxu0 0.0
  %548 = vmatprep.subr.mxu0 0.0
  %549 = vmatpush1.msra.mxu0 0.0
  %550 = vmatprep.subr.mxu0 0.0
  %551 = vmatpush1.msra.mxu0 0.0
  %552 = vmatprep.subr.mxu0 0.0
  %553 = vmatpush1.msra.mxu0 0.0
  %554 = vmatprep.subr.mxu0 0.0
  %555 = vmatpush1.msra.mxu0 0.0
  %556 = vmatprep.subr.mxu0 0.0
  %557 = vmatpush1.msra.mxu0 0.0
  %558 = vmatprep.subr.mxu0 0.0
  %559 = vmatpush1.msra.mxu0 0.0
  %560 = vmatprep.subr.mxu0 0.0
  %561 = vmatpush1.msra.mxu0 %v99
  %562 = vmatprep.subr.mxu0 0.0
  %563 = vmatpush1.msra.mxu0 %v98
  %564 = vmatprep.subr.mxu0 0.0
  %565 = vmatpush2.msra.mxu0 0.0
  %566 = vmatprep.subr.mxu0 0.0
  %567 = vmatpush2.msra.mxu0 0.0
  %568 = vmatprep.subr.mxu0 0.0
  %569 = vmatpush2.msra.mxu0 0.0
  %570 = vmatprep.subr.mxu0 0.0
  %571 = vmatpush2.msra.mxu0 0.0
  %572 = vmatprep.subr.mxu0 0.0
  %573 = vmatpush2.msra.mxu0 0.0
  %574 = vmatprep.subr.mxu0 0.0
  %575 = vmatpush2.msra.mxu0 0.0
  %576 = vmatprep.subr.mxu0 0.0
  %577 = vmatpush2.msra.mxu0 0.0
  %578 = vmatprep.subr.mxu0 0.0
  %579 = vmatpush2.msra.mxu0 0.0
  %580 = vmatprep.subr.mxu0 0.0
  %581 = vmatpush2.msra.mxu0 0.0
  %582 = vmatprep.subr.mxu0 0.0
  %583 = vmatpush2.msra.mxu0 0.0
  %584 = vmatprep.subr.mxu0 0.0
  %585 = vmatpush2.msra.mxu0 0.0
  %586 = vmatprep.subr.mxu0 0.0
  %587 = vmatpush2.msra.mxu0 0.0
  %588 = vmatprep.subr.mxu0 0.0
  %589 = vmatpush2.msra.mxu0 0.0
  %590 = vmatprep.subr.mxu0 0.0
  %591 = vmatpush2.msra.mxu0 0.0
  %592 = vmatprep.subr.mxu0 0.0
  %593 = vmatpush2.msra.mxu0 0.0
  %594 = vmatprep.subr.mxu0 0.0
  %595 = vmatpush2.msra.mxu0 0.0
  %596 = vmatprep.mubr.f32.mxu0 0.0
  %597 = vmatmul.mubr.f32.gmra.mxu0 %v437
  %v598 = vpop.f32.mrf.mxu0
  %v599 = vadd.f32 %v434, %v598
  %v600 = vpop.f32.mrf.mxu0
  %601 = vmatprep.mubr.f32.mxu0 0.0
  %602 = vmatmul.mubr.f32.gmra.mxu0 %v440
  %v603 = vpop.f32.mrf.mxu0
  %v604 = vadd.f32 %v434, %v603
  %v605 = vpop.f32.mrf.mxu0
  %606 = vmatprep.mubr.f32.mxu0 0.0
  %607 = vmatmul.mubr.f32.gmra.mxu0 %v443
  %v608 = vpop.f32.mrf.mxu0
  %v609 = vadd.f32 %v434, %v608
  %v610 = vpop.f32.mrf.mxu0
  %611 = vmatprep.mubr.f32.mxu0 0.0
  %612 = vmatmul.mubr.f32.gmra.mxu0 %v446
  %v613 = vpop.f32.mrf.mxu0
  %v614 = vadd.f32 %v434, %v613
  %v615 = vpop.f32.mrf.mxu0
  %616 = vmatprep.mubr.f32.mxu0 0.0
  %617 = vmatmul.mubr.f32.gmra.mxu0 %v449
  %v618 = vpop.f32.mrf.mxu0
  %v619 = vadd.f32 %v434, %v618
  %v620 = vpop.f32.mrf.mxu0
  %621 = vmatprep.mubr.f32.mxu0 0.0
  %622 = vmatmul.mubr.f32.gmra.mxu0 %v452
  %v623 = vpop.f32.mrf.mxu0
  %v624 = vadd.f32 %v434, %v623
  %v625 = vpop.f32.mrf.mxu0
  %626 = vmatprep.mubr.f32.mxu0 0.0
  %627 = vmatmul.mubr.f32.gmra.mxu0 %v455
  %v628 = vpop.f32.mrf.mxu0
  %v629 = vadd.f32 %v434, %v628
  %v630 = vpop.f32.mrf.mxu0
  %631 = vmatprep.mubr.f32.mxu0 0.0
  %632 = vmatmul.mubr.f32.gmra.mxu0 %v458
  %v633 = vpop.f32.mrf.mxu0
  %v634 = vadd.f32 %v434, %v633
  %v635 = vpop.f32.mrf.mxu0
  %636 = vmatprep.mubr.f32.mxu0 0.0
  %637 = vmatmul.mubr.f32.gmra.mxu0 %v461
  %v638 = vpop.f32.mrf.mxu0
  %v639 = vadd.f32 %v434, %v638
  %v640 = vpop.f32.mrf.mxu0
  %641 = vmatprep.mubr.f32.mxu0 0.0
  %642 = vmatmul.mubr.f32.gmra.mxu0 %v464
  %v643 = vpop.f32.mrf.mxu0
  %v644 = vadd.f32 %v434, %v643
  %v645 = vpop.f32.mrf.mxu0
  %646 = vmatprep.mubr.f32.mxu0 0.0
  %647 = vmatmul.mubr.f32.gmra.mxu0 %v467
  %v648 = vpop.f32.mrf.mxu0
  %v649 = vadd.f32 %v434, %v648
  %v650 = vpop.f32.mrf.mxu0
  %651 = vmatprep.mubr.f32.mxu0 0.0
  %652 = vmatmul.mubr.f32.gmra.mxu0 %v470
  %v653 = vpop.f32.mrf.mxu0
  %v654 = vadd.f32 %v434, %v653
  %v655 = vpop.f32.mrf.mxu0
  %656 = vmatprep.mubr.f32.mxu0 0.0
  %657 = vmatmul.mubr.f32.gmra.mxu0 %v473
  %v658 = vpop.f32.mrf.mxu0
  %v659 = vadd.f32 %v434, %v658
  %v660 = vpop.f32.mrf.mxu0
  %661 = vmatprep.mubr.f32.mxu0 0.0
  %662 = vmatmul.mubr.f32.gmra.mxu0 %v476
  %v663 = vpop.f32.mrf.mxu0
  %v664 = vadd.f32 %v434, %v663
  %v665 = vpop.f32.mrf.mxu0
  %666 = vmatprep.mubr.f32.mxu0 0.0
  %667 = vmatmul.mubr.f32.gmra.mxu0 %v479
  %v668 = vpop.f32.mrf.mxu0
  %v669 = vadd.f32 %v434, %v668
  %v670 = vpop.f32.mrf.mxu0
  %671 = vmatprep.mubr.f32.mxu0 0.0
  %672 = vmatmul.mubr.f32.gmra.mxu0 %v482
  %v673 = vpop.f32.mrf.mxu0
  %v674 = vadd.f32 %v434, %v673
  %v675 = vpop.f32.mrf.mxu0
  %676 = vmatprep.mubr.f32.mxu0 0.0
  %677 = vmatmul.mubr.f32.gmra.mxu0 %v485
  %v678 = vpop.f32.mrf.mxu0
  %v679 = vadd.f32 %v434, %v678
  %v680 = vpop.f32.mrf.mxu0
  %681 = vmatprep.mubr.f32.mxu0 0.0
  %682 = vmatmul.mubr.f32.gmra.mxu0 %v488
  %v683 = vpop.f32.mrf.mxu0
  %v684 = vadd.f32 %v434, %v683
  %v685 = vpop.f32.mrf.mxu0
  %686 = vmatprep.mubr.f32.mxu0 0.0
  %687 = vmatmul.mubr.f32.gmra.mxu0 %v491
  %v688 = vpop.f32.mrf.mxu0
  %v689 = vadd.f32 %v434, %v688
  %v690 = vpop.f32.mrf.mxu0
  %691 = vmatprep.mubr.f32.mxu0 0.0
  %692 = vmatmul.mubr.f32.gmra.mxu0 %v494
  %v693 = vpop.f32.mrf.mxu0
  %v694 = vadd.f32 %v434, %v693
  %v695 = vpop.f32.mrf.mxu0
  %696 = vmatprep.mubr.f32.mxu0 0.0
  %697 = vmatmul.mubr.f32.gmra.mxu0 %v497
  %v698 = vpop.f32.mrf.mxu0
  %v699 = vadd.f32 %v434, %v698
  %v700 = vpop.f32.mrf.mxu0
  %701 = vmatprep.mubr.f32.mxu0 0.0
  %702 = vmatmul.mubr.f32.gmra.mxu0 %v500
  %v703 = vpop.f32.mrf.mxu0
  %v704 = vadd.f32 %v434, %v703
  %v705 = vpop.f32.mrf.mxu0
  %706 = vmatprep.mubr.f32.mxu0 0.0
  %707 = vmatmul.mubr.f32.gmra.mxu0 %v503
  %v708 = vpop.f32.mrf.mxu0
  %v709 = vadd.f32 %v434, %v708
  %v710 = vpop.f32.mrf.mxu0
  %711 = vmatprep.mubr.f32.mxu0 0.0
  %712 = vmatmul.mubr.f32.gmra.mxu0 %v506
  %v713 = vpop.f32.mrf.mxu0
  %v714 = vadd.f32 %v434, %v713
  %v715 = vpop.f32.mrf.mxu0
  %716 = vmatprep.mubr.f32.mxu0 0.0
  %717 = vmatmul.mubr.f32.gmra.mxu0 %v509
  %v718 = vpop.f32.mrf.mxu0
  %v719 = vadd.f32 %v434, %v718
  %v720 = vpop.f32.mrf.mxu0
  %721 = vmatprep.mubr.f32.mxu0 0.0
  %722 = vmatmul.mubr.f32.gmra.mxu0 %v512
  %v723 = vpop.f32.mrf.mxu0
  %v724 = vadd.f32 %v434, %v723
  %v725 = vpop.f32.mrf.mxu0
  %726 = vmatprep.mubr.f32.mxu0 0.0
  %727 = vmatmul.mubr.f32.gmra.mxu0 %v515
  %v728 = vpop.f32.mrf.mxu0
  %v729 = vadd.f32 %v434, %v728
  %v730 = vpop.f32.mrf.mxu0
  %731 = vmatprep.mubr.f32.mxu0 0.0
  %732 = vmatmul.mubr.f32.gmra.mxu0 %v518
  %v733 = vpop.f32.mrf.mxu0
  %v734 = vadd.f32 %v434, %v733
  %v735 = vpop.f32.mrf.mxu0
  %736 = vmatprep.mubr.f32.mxu0 0.0
  %737 = vmatmul.mubr.f32.gmra.mxu0 %v521
  %v738 = vpop.f32.mrf.mxu0
  %v739 = vadd.f32 %v434, %v738
  %v740 = vpop.f32.mrf.mxu0
  %741 = vmatprep.mubr.f32.mxu0 0.0
  %742 = vmatmul.mubr.f32.gmra.mxu0 %v524
  %v743 = vpop.f32.mrf.mxu0
  %v744 = vadd.f32 %v434, %v743
  %v745 = vpop.f32.mrf.mxu0
  %746 = vmatprep.mubr.f32.mxu0 0.0
  %747 = vmatmul.mubr.f32.gmra.mxu0 %v527
  %v748 = vpop.f32.mrf.mxu0
  %v749 = vadd.f32 %v434, %v748
  %v750 = vpop.f32.mrf.mxu0
  %751 = vmatprep.mubr.f32.mxu0 0.0
  %752 = vmatmul.mubr.f32.gmra.mxu0 %v530
  %v753 = vpop.f32.mrf.mxu0
  %v754 = vadd.f32 %v434, %v753
  %v755 = vpop.f32.mrf.mxu0
  %756 = vdwg.mxu0
  %vm757 = vcmask 523264
  %758 = vst.msk [vmem:[#allocation2] sm:$0xff] %vm757, %v272
  %759 = vst.msk [vmem:[#allocation2 + $0x8] sm:$0xff] %vm757, %v277
  %760 = vst.msk [vmem:[#allocation2 + $0x10] sm:$0xff] %vm757, %v282
  %761 = vst.msk [vmem:[#allocation2 + $0x18] sm:$0xff] %vm757, %v287
  %762 = vst.msk [vmem:[#allocation2 + $0x20] sm:$0xff] %vm757, %v292
  %763 = vst.msk [vmem:[#allocation2 + $0x28] sm:$0xff] %vm757, %v297
  %764 = vst.msk [vmem:[#allocation2 + $0x30] sm:$0xff] %vm757, %v302
  %765 = vst.msk [vmem:[#allocation2 + $0x38] sm:$0xff] %vm757, %v307
  %766 = vst.msk [vmem:[#allocation2 + $0x40] sm:$0xff] %vm757, %v312
  %767 = vst.msk [vmem:[#allocation2 + $0x48] sm:$0xff] %vm757, %v317
  %768 = vst.msk [vmem:[#allocation2 + $0x50] sm:$0xff] %vm757, %v322
  %769 = vst.msk [vmem:[#allocation2 + $0x58] sm:$0xff] %vm757, %v327
  %770 = vst.msk [vmem:[#allocation2 + $0x60] sm:$0xff] %vm757, %v332
  %771 = vst.msk [vmem:[#allocation2 + $0x68] sm:$0xff] %vm757, %v337
  %772 = vst.msk [vmem:[#allocation2 + $0x70] sm:$0xff] %vm757, %v342
  %773 = vst.msk [vmem:[#allocation2 + $0x78] sm:$0xff] %vm757, %v347
  %774 = vst.msk [vmem:[#allocation2 + $0x80] sm:$0xff] %vm757, %v352
  %775 = vst.msk [vmem:[#allocation2 + $0x88] sm:$0xff] %vm757, %v357
  %776 = vst.msk [vmem:[#allocation2 + $0x90] sm:$0xff] %vm757, %v362
  %777 = vst.msk [vmem:[#allocation2 + $0x98] sm:$0xff] %vm757, %v367
  %778 = vst.msk [vmem:[#allocation2 + $0xa0] sm:$0xff] %vm757, %v372
  %779 = vst.msk [vmem:[#allocation2 + $0xa8] sm:$0xff] %vm757, %v377
  %780 = vst.msk [vmem:[#allocation2 + $0xb0] sm:$0xff] %vm757, %v382
  %781 = vst.msk [vmem:[#allocation2 + $0xb8] sm:$0xff] %vm757, %v387
  %782 = vst.msk [vmem:[#allocation2 + $0xc0] sm:$0xff] %vm757, %v392
  %783 = vst.msk [vmem:[#allocation2 + $0xc8] sm:$0xff] %vm757, %v397
  %784 = vst.msk [vmem:[#allocation2 + $0xd0] sm:$0xff] %vm757, %v402
  %785 = vst.msk [vmem:[#allocation2 + $0xd8] sm:$0xff] %vm757, %v407
  %786 = vst.msk [vmem:[#allocation2 + $0xe0] sm:$0xff] %vm757, %v412
  %787 = vst.msk [vmem:[#allocation2 + $0xe8] sm:$0xff] %vm757, %v417
  %788 = vst.msk [vmem:[#allocation2 + $0xf0] sm:$0xff] %vm757, %v422
  %789 = vst.msk [vmem:[#allocation2 + $0xf8] sm:$0xff] %vm757, %v427
  %822 = vrot.lane.b32.xlu0 %v272, 64
  %v823 = vpop.permute.xlu0 %822
  %824 = vrot.lane.b32.xlu0 %v277, 64
  %v825 = vpop.permute.xlu0 %824
  %826 = vrot.lane.b32.xlu0 %v282, 64
  %v827 = vpop.permute.xlu0 %826
  %828 = vrot.lane.b32.xlu0 %v287, 64
  %v829 = vpop.permute.xlu0 %828
  %830 = vrot.lane.b32.xlu0 %v292, 64
  %v831 = vpop.permute.xlu0 %830
  %832 = vrot.lane.b32.xlu0 %v297, 64
  %v833 = vpop.permute.xlu0 %832
  %834 = vrot.lane.b32.xlu0 %v302, 64
  %v835 = vpop.permute.xlu0 %834
  %836 = vrot.lane.b32.xlu0 %v307, 64
  %v837 = vpop.permute.xlu0 %836
  %838 = vrot.lane.b32.xlu0 %v312, 64
  %v839 = vpop.permute.xlu0 %838
  %840 = vrot.lane.b32.xlu0 %v317, 64
  %v841 = vpop.permute.xlu0 %840
  %842 = vrot.lane.b32.xlu0 %v322, 64
  %v843 = vpop.permute.xlu0 %842
  %844 = vrot.lane.b32.xlu0 %v327, 64
  %v845 = vpop.permute.xlu0 %844
  %846 = vrot.lane.b32.xlu0 %v332, 64
  %v847 = vpop.permute.xlu0 %846
  %848 = vrot.lane.b32.xlu0 %v337, 64
  %v849 = vpop.permute.xlu0 %848
  %850 = vrot.lane.b32.xlu0 %v342, 64
  %v851 = vpop.permute.xlu0 %850
  %852 = vrot.lane.b32.xlu0 %v347, 64
  %v853 = vpop.permute.xlu0 %852
  %854 = vrot.lane.b32.xlu0 %v352, 64
  %v855 = vpop.permute.xlu0 %854
  %856 = vrot.lane.b32.xlu0 %v357, 64
  %v857 = vpop.permute.xlu0 %856
  %858 = vrot.lane.b32.xlu0 %v362, 64
  %v859 = vpop.permute.xlu0 %858
  %860 = vrot.lane.b32.xlu0 %v367, 64
  %v861 = vpop.permute.xlu0 %860
  %862 = vrot.lane.b32.xlu0 %v372, 64
  %v863 = vpop.permute.xlu0 %862
  %864 = vrot.lane.b32.xlu0 %v377, 64
  %v865 = vpop.permute.xlu0 %864
  %866 = vrot.lane.b32.xlu0 %v382, 64
  %v867 = vpop.permute.xlu0 %866
  %868 = vrot.lane.b32.xlu0 %v387, 64
  %v869 = vpop.permute.xlu0 %868
  %870 = vrot.lane.b32.xlu0 %v392, 64
  %v871 = vpop.permute.xlu0 %870
  %872 = vrot.lane.b32.xlu0 %v397, 64
  %v873 = vpop.permute.xlu0 %872
  %874 = vrot.lane.b32.xlu0 %v402, 64
  %v875 = vpop.permute.xlu0 %874
  %876 = vrot.lane.b32.xlu0 %v407, 64
  %v877 = vpop.permute.xlu0 %876
  %878 = vrot.lane.b32.xlu0 %v412, 64
  %v879 = vpop.permute.xlu0 %878
  %880 = vrot.lane.b32.xlu0 %v417, 64
  %v881 = vpop.permute.xlu0 %880
  %882 = vrot.lane.b32.xlu0 %v422, 64
  %v883 = vpop.permute.xlu0 %882
  %884 = vrot.lane.b32.xlu0 %v427, 64
  %v885 = vpop.permute.xlu0 %884
  %918 = vst.msk [vmem:[#allocation3] sm:$0xff] %vm757, %v823
  %919 = vst.msk [vmem:[#allocation3 + $0x8] sm:$0xff] %vm757, %v825
  %920 = vst.msk [vmem:[#allocation3 + $0x10] sm:$0xff] %vm757, %v827
  %921 = vst.msk [vmem:[#allocation3 + $0x18] sm:$0xff] %vm757, %v829
  %922 = vst.msk [vmem:[#allocation3 + $0x20] sm:$0xff] %vm757, %v831
  %923 = vst.msk [vmem:[#allocation3 + $0x28] sm:$0xff] %vm757, %v833
  %924 = vst.msk [vmem:[#allocation3 + $0x30] sm:$0xff] %vm757, %v835
  %925 = vst.msk [vmem:[#allocation3 + $0x38] sm:$0xff] %vm757, %v837
  %926 = vst.msk [vmem:[#allocation3 + $0x40] sm:$0xff] %vm757, %v839
  %927 = vst.msk [vmem:[#allocation3 + $0x48] sm:$0xff] %vm757, %v841
  %928 = vst.msk [vmem:[#allocation3 + $0x50] sm:$0xff] %vm757, %v843
  %929 = vst.msk [vmem:[#allocation3 + $0x58] sm:$0xff] %vm757, %v845
  %930 = vst.msk [vmem:[#allocation3 + $0x60] sm:$0xff] %vm757, %v847
  %931 = vst.msk [vmem:[#allocation3 + $0x68] sm:$0xff] %vm757, %v849
  %932 = vst.msk [vmem:[#allocation3 + $0x70] sm:$0xff] %vm757, %v851
  %933 = vst.msk [vmem:[#allocation3 + $0x78] sm:$0xff] %vm757, %v853
  %934 = vst.msk [vmem:[#allocation3 + $0x80] sm:$0xff] %vm757, %v855
  %935 = vst.msk [vmem:[#allocation3 + $0x88] sm:$0xff] %vm757, %v857
  %936 = vst.msk [vmem:[#allocation3 + $0x90] sm:$0xff] %vm757, %v859
  %937 = vst.msk [vmem:[#allocation3 + $0x98] sm:$0xff] %vm757, %v861
  %938 = vst.msk [vmem:[#allocation3 + $0xa0] sm:$0xff] %vm757, %v863
  %939 = vst.msk [vmem:[#allocation3 + $0xa8] sm:$0xff] %vm757, %v865
  %940 = vst.msk [vmem:[#allocation3 + $0xb0] sm:$0xff] %vm757, %v867
  %941 = vst.msk [vmem:[#allocation3 + $0xb8] sm:$0xff] %vm757, %v869
  %942 = vst.msk [vmem:[#allocation3 + $0xc0] sm:$0xff] %vm757, %v871
  %943 = vst.msk [vmem:[#allocation3 + $0xc8] sm:$0xff] %vm757, %v873
  %944 = vst.msk [vmem:[#allocation3 + $0xd0] sm:$0xff] %vm757, %v875
  %945 = vst.msk [vmem:[#allocation3 + $0xd8] sm:$0xff] %vm757, %v877
  %946 = vst.msk [vmem:[#allocation3 + $0xe0] sm:$0xff] %vm757, %v879
  %947 = vst.msk [vmem:[#allocation3 + $0xe8] sm:$0xff] %vm757, %v881
  %948 = vst.msk [vmem:[#allocation3 + $0xf0] sm:$0xff] %vm757, %v883
  %949 = vst.msk [vmem:[#allocation3 + $0xf8] sm:$0xff] %vm757, %v885
  %950 = vst.msk [vmem:[#allocation4] sm:$0xff] %vm757, %v599
  %951 = vst.msk [vmem:[#allocation4 + $0x8] sm:$0xff] %vm757, %v604
  %952 = vst.msk [vmem:[#allocation4 + $0x10] sm:$0xff] %vm757, %v609
  %953 = vst.msk [vmem:[#allocation4 + $0x18] sm:$0xff] %vm757, %v614
  %954 = vst.msk [vmem:[#allocation4 + $0x20] sm:$0xff] %vm757, %v619
  %955 = vst.msk [vmem:[#allocation4 + $0x28] sm:$0xff] %vm757, %v624
  %956 = vst.msk [vmem:[#allocation4 + $0x30] sm:$0xff] %vm757, %v629
  %957 = vst.msk [vmem:[#allocation4 + $0x38] sm:$0xff] %vm757, %v634
  %958 = vst.msk [vmem:[#allocation4 + $0x40] sm:$0xff] %vm757, %v639
  %959 = vst.msk [vmem:[#allocation4 + $0x48] sm:$0xff] %vm757, %v644
  %960 = vst.msk [vmem:[#allocation4 + $0x50] sm:$0xff] %vm757, %v649
  %961 = vst.msk [vmem:[#allocation4 + $0x58] sm:$0xff] %vm757, %v654
  %962 = vst.msk [vmem:[#allocation4 + $0x60] sm:$0xff] %vm757, %v659
  %963 = vst.msk [vmem:[#allocation4 + $0x68] sm:$0xff] %vm757, %v664
  %964 = vst.msk [vmem:[#allocation4 + $0x70] sm:$0xff] %vm757, %v669
  %965 = vst.msk [vmem:[#allocation4 + $0x78] sm:$0xff] %vm757, %v674
  %966 = vst.msk [vmem:[#allocation4 + $0x80] sm:$0xff] %vm757, %v679
  %967 = vst.msk [vmem:[#allocation4 + $0x88] sm:$0xff] %vm757, %v684
  %968 = vst.msk [vmem:[#allocation4 + $0x90] sm:$0xff] %vm757, %v689
  %969 = vst.msk [vmem:[#allocation4 + $0x98] sm:$0xff] %vm757, %v694
  %970 = vst.msk [vmem:[#allocation4 + $0xa0] sm:$0xff] %vm757, %v699
  %971 = vst.msk [vmem:[#allocation4 + $0xa8] sm:$0xff] %vm757, %v704
  %972 = vst.msk [vmem:[#allocation4 + $0xb0] sm:$0xff] %vm757, %v709
  %973 = vst.msk [vmem:[#allocation4 + $0xb8] sm:$0xff] %vm757, %v714
  %974 = vst.msk [vmem:[#allocation4 + $0xc0] sm:$0xff] %vm757, %v719
  %975 = vst.msk [vmem:[#allocation4 + $0xc8] sm:$0xff] %vm757, %v724
  %976 = vst.msk [vmem:[#allocation4 + $0xd0] sm:$0xff] %vm757, %v729
  %977 = vst.msk [vmem:[#allocation4 + $0xd8] sm:$0xff] %vm757, %v734
  %978 = vst.msk [vmem:[#allocation4 + $0xe0] sm:$0xff] %vm757, %v739
  %979 = vst.msk [vmem:[#allocation4 + $0xe8] sm:$0xff] %vm757, %v744
  %980 = vst.msk [vmem:[#allocation4 + $0xf0] sm:$0xff] %vm757, %v749
  %981 = vst.msk [vmem:[#allocation4 + $0xf8] sm:$0xff] %vm757, %v754
  %1014 = vrot.lane.b32.xlu0 %v599, 64
  %v1015 = vpop.permute.xlu0 %1014
  %1016 = vrot.lane.b32.xlu0 %v604, 64
  %v1017 = vpop.permute.xlu0 %1016
  %1018 = vrot.lane.b32.xlu0 %v609, 64
  %v1019 = vpop.permute.xlu0 %1018
  %1020 = vrot.lane.b32.xlu0 %v614, 64
  %v1021 = vpop.permute.xlu0 %1020
  %1022 = vrot.lane.b32.xlu0 %v619, 64
  %v1023 = vpop.permute.xlu0 %1022
  %1024 = vrot.lane.b32.xlu0 %v624, 64
  %v1025 = vpop.permute.xlu0 %1024
  %1026 = vrot.lane.b32.xlu0 %v629, 64
  %v1027 = vpop.permute.xlu0 %1026
  %1028 = vrot.lane.b32.xlu0 %v634, 64
  %v1029 = vpop.permute.xlu0 %1028
  %1030 = vrot.lane.b32.xlu0 %v639, 64
  %v1031 = vpop.permute.xlu0 %1030
  %1032 = vrot.lane.b32.xlu0 %v644, 64
  %v1033 = vpop.permute.xlu0 %1032
  %1034 = vrot.lane.b32.xlu0 %v649, 64
  %v1035 = vpop.permute.xlu0 %1034
  %1036 = vrot.lane.b32.xlu0 %v654, 64
  %v1037 = vpop.permute.xlu0 %1036
  %1038 = vrot.lane.b32.xlu0 %v659, 64
  %v1039 = vpop.permute.xlu0 %1038
  %1040 = vrot.lane.b32.xlu0 %v664, 64
  %v1041 = vpop.permute.xlu0 %1040
  %1042 = vrot.lane.b32.xlu0 %v669, 64
  %v1043 = vpop.permute.xlu0 %1042
  %1044 = vrot.lane.b32.xlu0 %v674, 64
  %v1045 = vpop.permute.xlu0 %1044
  %1046 = vrot.lane.b32.xlu0 %v679, 64
  %v1047 = vpop.permute.xlu0 %1046
  %1048 = vrot.lane.b32.xlu0 %v684, 64
  %v1049 = vpop.permute.xlu0 %1048
  %1050 = vrot.lane.b32.xlu0 %v689, 64
  %v1051 = vpop.permute.xlu0 %1050
  %1052 = vrot.lane.b32.xlu0 %v694, 64
  %v1053 = vpop.permute.xlu0 %1052
  %1054 = vrot.lane.b32.xlu0 %v699, 64
  %v1055 = vpop.permute.xlu0 %1054
  %1056 = vrot.lane.b32.xlu0 %v704, 64
  %v1057 = vpop.permute.xlu0 %1056
  %1058 = vrot.lane.b32.xlu0 %v709, 64
  %v1059 = vpop.permute.xlu0 %1058
  %1060 = vrot.lane.b32.xlu0 %v714, 64
  %v1061 = vpop.permute.xlu0 %1060
  %1062 = vrot.lane.b32.xlu0 %v719, 64
  %v1063 = vpop.permute.xlu0 %1062
  %1064 = vrot.lane.b32.xlu0 %v724, 64
  %v1065 = vpop.permute.xlu0 %1064
  %1066 = vrot.lane.b32.xlu0 %v729, 64
  %v1067 = vpop.permute.xlu0 %1066
  %1068 = vrot.lane.b32.xlu0 %v734, 64
  %v1069 = vpop.permute.xlu0 %1068
  %1070 = vrot.lane.b32.xlu0 %v739, 64
  %v1071 = vpop.permute.xlu0 %1070
  %1072 = vrot.lane.b32.xlu0 %v744, 64
  %v1073 = vpop.permute.xlu0 %1072
  %1074 = vrot.lane.b32.xlu0 %v749, 64
  %v1075 = vpop.permute.xlu0 %1074
  %1076 = vrot.lane.b32.xlu0 %v754, 64
  %v1077 = vpop.permute.xlu0 %1076
  %1110 = vst.msk [vmem:[#allocation5] sm:$0xff] %vm757, %v1015
  %1111 = vst.msk [vmem:[#allocation5 + $0x8] sm:$0xff] %vm757, %v1017
  %1112 = vst.msk [vmem:[#allocation5 + $0x10] sm:$0xff] %vm757, %v1019
  %1113 = vst.msk [vmem:[#allocation5 + $0x18] sm:$0xff] %vm757, %v1021
  %1114 = vst.msk [vmem:[#allocation5 + $0x20] sm:$0xff] %vm757, %v1023
  %1115 = vst.msk [vmem:[#allocation5 + $0x28] sm:$0xff] %vm757, %v1025
  %1116 = vst.msk [vmem:[#allocation5 + $0x30] sm:$0xff] %vm757, %v1027
  %1117 = vst.msk [vmem:[#allocation5 + $0x38] sm:$0xff] %vm757, %v1029
  %1118 = vst.msk [vmem:[#allocation5 + $0x40] sm:$0xff] %vm757, %v1031
  %1119 = vst.msk [vmem:[#allocation5 + $0x48] sm:$0xff] %vm757, %v1033
  %1120 = vst.msk [vmem:[#allocation5 + $0x50] sm:$0xff] %vm757, %v1035
  %1121 = vst.msk [vmem:[#allocation5 + $0x58] sm:$0xff] %vm757, %v1037
  %1122 = vst.msk [vmem:[#allocation5 + $0x60] sm:$0xff] %vm757, %v1039
  %1123 = vst.msk [vmem:[#allocation5 + $0x68] sm:$0xff] %vm757, %v1041
  %1124 = vst.msk [vmem:[#allocation5 + $0x70] sm:$0xff] %vm757, %v1043
  %1125 = vst.msk [vmem:[#allocation5 + $0x78] sm:$0xff] %vm757, %v1045
  %1126 = vst.msk [vmem:[#allocation5 + $0x80] sm:$0xff] %vm757, %v1047
  %1127 = vst.msk [vmem:[#allocation5 + $0x88] sm:$0xff] %vm757, %v1049
  %1128 = vst.msk [vmem:[#allocation5 + $0x90] sm:$0xff] %vm757, %v1051
  %1129 = vst.msk [vmem:[#allocation5 + $0x98] sm:$0xff] %vm757, %v1053
  %1130 = vst.msk [vmem:[#allocation5 + $0xa0] sm:$0xff] %vm757, %v1055
  %1131 = vst.msk [vmem:[#allocation5 + $0xa8] sm:$0xff] %vm757, %v1057
  %1132 = vst.msk [vmem:[#allocation5 + $0xb0] sm:$0xff] %vm757, %v1059
  %1133 = vst.msk [vmem:[#allocation5 + $0xb8] sm:$0xff] %vm757, %v1061
  %1134 = vst.msk [vmem:[#allocation5 + $0xc0] sm:$0xff] %vm757, %v1063
  %1135 = vst.msk [vmem:[#allocation5 + $0xc8] sm:$0xff] %vm757, %v1065
  %1136 = vst.msk [vmem:[#allocation5 + $0xd0] sm:$0xff] %vm757, %v1067
  %1137 = vst.msk [vmem:[#allocation5 + $0xd8] sm:$0xff] %vm757, %v1069
  %1138 = vst.msk [vmem:[#allocation5 + $0xe0] sm:$0xff] %vm757, %v1071
  %1139 = vst.msk [vmem:[#allocation5 + $0xe8] sm:$0xff] %vm757, %v1073
  %1140 = vst.msk [vmem:[#allocation5 + $0xf0] sm:$0xff] %vm757, %v1075
  %1141 = vst.msk [vmem:[#allocation5 + $0xf8] sm:$0xff] %vm757, %v1077
  %v1142 = vld [vmem:[%s4] sm:$0xff]
  %v1143 = vld [vmem:[%s4 + $0x8] sm:$0xff]
  %v1144 = vld [vmem:[%s4 + $0x10] sm:$0xff]
  %v1145 = vld [vmem:[%s4 + $0x18] sm:$0xff]
  %v1146 = vld [vmem:[%s4 + $0x20] sm:$0xff]
  %v1147 = vld [vmem:[%s4 + $0x28] sm:$0xff]
  %v1148 = vld [vmem:[%s4 + $0x30] sm:$0xff]
  %v1149 = vld [vmem:[%s4 + $0x38] sm:$0xff]
  loop: start=0, step=1, limit=16
  $region38: #{seqnet_forward.1} parent=0 // loop_pre_header
    _
  $region39: #{seqnet_forward.1} parent=0 // loop_header
    %s1151 = sphi 0, %s1155
    %p1152 = scmp.ge.s32.totalorder %s1151, 16
    %v1156 = vphi 0.0, %v1310
    %v1157 = vphi 0.0, %v1311
    %v1158 = vphi 0.0, %v1460
    %v1159 = vphi 0.0, %v1461
    %v1160 = vphi 0.0, %v1609
    %v1161 = vphi 0.0, %v1610
    %v1162 = vphi 0.0, %v1758
    %v1163 = vphi 0.0, %v1759
    %v1164 = vphi 0.0, %v1298
    %v1165 = vphi 0.0, %v1299
    %v1166 = vphi 0.0, %v1448
    %v1167 = vphi 0.0, %v1449
    %v1168 = vphi 0.0, %v1597
    %v1169 = vphi 0.0, %v1598
    %v1170 = vphi 0.0, %v1746
    %v1171 = vphi 0.0, %v1747
  $region40: #{seqnet_forward.1} parent=0 // loop_header_branch
    %1154 = sbr.rel (%p1152) target = $region44
  $region41: #{seqnet_forward.1} parent=0 // loop_body
    %s1172 = ssub.s32 15, %s1151
    %s1173 = smul.u32 %s1151, 16
    %s1174 = scalar_lea.vmem [#allocation2], %s1173
    %v1175 = vld [vmem:[%s1174] sm:$0xff]
    %v1176 = vld [vmem:[%s1174 + $0x8] sm:$0xff]
    %1179 = vrot.lane.b32.xlu0 %v1156, 80
    %v1180 = vpop.permute.xlu0 %1179
    %1181 = vrot.lane.b32.xlu0 %v1157, 80
    %v1182 = vpop.permute.xlu0 %1181
    %v1183 = vsel %vm108, %v1180, 0
    %v1185 = vsel %vm108, %v1182, 0
    %1187 = vmatprep.subr.mxu0 0.0
    %1188 = vmatpush1.msra.mxu0 0.0
    %1189 = vmatprep.subr.mxu0 0.0
    %1190 = vmatpush1.msra.mxu0 0.0
    %1191 = vmatprep.subr.mxu0 0.0
    %1192 = vmatpush1.msra.mxu0 0.0
    %1193 = vmatprep.subr.mxu0 0.0
    %1194 = vmatpush1.msra.mxu0 0.0
    %1195 = vmatprep.subr.mxu0 0.0
    %1196 = vmatpush1.msra.mxu0 0.0
    %1197 = vmatprep.subr.mxu0 0.0
    %1198 = vmatpush1.msra.mxu0 0.0
    %1199 = vmatprep.subr.mxu0 0.0
    %1200 = vmatpush1.msra.mxu0 0.0
    %1201 = vmatprep.subr.mxu0 0.0
    %1202 = vmatpush1.msra.mxu0 0.0
    %1203 = vmatprep.subr.mxu0 0.0
    %1204 = vmatpush1.msra.mxu0 0.0
    %1205 = vmatprep.subr.mxu0 0.0
    %1206 = vmatpush1.msra.mxu0 0.0
    %1207 = vmatprep.subr.mxu0 0.0
    %1208 = vmatpush1.msra.mxu0 0.0
    %1209 = vmatprep.subr.mxu0 0.0
    %1210 = vmatpush1.msra.mxu0 0.0
    %1211 = vmatprep.subr.mxu0 0.0
    %1212 = vmatpush1.msra.mxu0 0.0
    %1213 = vmatprep.subr.mxu0 0.0
    %1214 = vmatpush1.msra.mxu0 0.0
    %1215 = vmatprep.subr.mxu0 0.0
    %1216 = vmatpush1.msra.mxu0 %v1143
    %1217 = vmatprep.subr.mxu0 0.0
    %1218 = vmatpush1.msra.mxu0 %v1142
    %1219 = vmatprep.subr.mxu0 0.0
    %1220 = vmatpush2.msra.mxu0 0.0
    %1221 = vmatprep.subr.mxu0 0.0
    %1222 = vmatpush2.msra.mxu0 0.0
    %1223 = vmatprep.subr.mxu0 0.0
    %1224 = vmatpush2.msra.mxu0 0.0
    %1225 = vmatprep.subr.mxu0 0.0
    %1226 = vmatpush2.msra.mxu0 0.0
    %1227 = vmatprep.subr.mxu0 0.0
    %1228 = vmatpush2.msra.mxu0 0.0
    %1229 = vmatprep.subr.mxu0 0.0
    %1230 = vmatpush2.msra.mxu0 0.0
    %1231 = vmatprep.subr.mxu0 0.0
    %1232 = vmatpush2.msra.mxu0 0.0
    %1233 = vmatprep.subr.mxu0 0.0
    %1234 = vmatpush2.msra.mxu0 0.0
    %1235 = vmatprep.subr.mxu0 0.0
    %1236 = vmatpush2.msra.mxu0 0.0
    %1237 = vmatprep.subr.mxu0 0.0
    %1238 = vmatpush2.msra.mxu0 0.0
    %1239 = vmatprep.subr.mxu0 0.0
    %1240 = vmatpush2.msra.mxu0 0.0
    %1241 = vmatprep.subr.mxu0 0.0
    %1242 = vmatpush2.msra.mxu0 0.0
    %1243 = vmatprep.subr.mxu0 0.0
    %1244 = vmatpush2.msra.mxu0 0.0
    %1245 = vmatprep.subr.mxu0 0.0
    %1246 = vmatpush2.msra.mxu0 0.0
    %1247 = vmatprep.subr.mxu0 0.0
    %1248 = vmatpush2.msra.mxu0 0.0
    %1249 = vmatprep.subr.mxu0 0.0
    %1250 = vmatpush2.msra.mxu0 0.0
    %1251 = vmatprep.mubr.f32.mxu0 0.0
    %1252 = vmatmul.mubr.f32.gmra.mxu0 %v1183
    %v1253 = vpop.f32.mrf.mxu0
    %v1254 = vadd.f32 0.0, %v1253
    %v1255 = vpop.f32.mrf.mxu0
    %1256 = vmatprep.mubr.f32.mxu0 0.0
    %1257 = vmatmul.mubr.f32.gmra.mxu0 %v1185
    %v1258 = vpop.f32.mrf.mxu0
    %v1259 = vadd.f32 0.0, %v1258
    %v1260 = vpop.f32.mrf.mxu0
    %1261 = vdwg.mxu0
    %v1262 = vadd.f32 %v1175, %v1254
    %v1263 = vadd.f32 %v1176, %v1259
    %v1264 = vxor.u32 %v1262, 2147483648
    %v1265 = vxor.u32 %v1263, 2147483648
    %v1266 = vmul.f32 %v1264, 1.442695
    %v1267 = vpow.pop %v1266
    %v1268 = vmul.f32 %v1265, 1.442695
    %v1269 = vpow.pop %v1268
    %v1270 = vadd.f32 %v1267, 1.0
    %v1271 = vadd.f32 %v1269, 1.0
    %v1272 = vrcp.pop %v1270
    %v1273 = vmul.f32 1.0, %v1272
    %v1274 = vrcp.pop %v1271
    %v1275 = vmul.f32 1.0, %v1274
    %v1276 = vtanh.pop %v1262
    %v1277 = vtanh.pop %v1263
    %v1278 = vmul.f32 %v1273, %v1164
    %v1279 = vmul.f32 %v1275, %v1165
    %1282 = vrot.lane.b32.xlu0 %v1276, 96
    %v1283 = vpop.permute.xlu0 %1282
    %1284 = vrot.lane.b32.xlu0 %v1277, 96
    %v1285 = vpop.permute.xlu0 %1284
    %v1288 = vmul.f32 %v1273, %v1283
    %v1289 = vmul.f32 %v1275, %v1285
    %1292 = vrot.lane.b32.xlu0 %v1288, 16
    %v1293 = vpop.permute.xlu0 %1292
    %1294 = vrot.lane.b32.xlu0 %v1289, 16
    %v1295 = vpop.permute.xlu0 %1294
    %v1298 = vadd.f32 %v1278, %v1293
    %v1299 = vadd.f32 %v1279, %v1295
    %v1300 = vtanh.pop %v1298
    %v1301 = vtanh.pop %v1299
    %1304 = vrot.lane.b32.xlu0 %v1300, 32
    %v1305 = vpop.permute.xlu0 %1304
    %1306 = vrot.lane.b32.xlu0 %v1301, 32
    %v1307 = vpop.permute.xlu0 %1306
    %v1310 = vmul.f32 %v1273, %v1305
    %v1311 = vmul.f32 %v1275, %v1307
    %1314 = vrot.lane.b32.xlu0 %v1310, 80
    %v1315 = vpop.permute.xlu0 %1314
    %1316 = vrot.lane.b32.xlu0 %v1311, 80
    %v1317 = vpop.permute.xlu0 %1316
    %s1320 = scalar_lea.vmem [#allocation6], %s1173
    %1321 = vst.msk [vmem:[%s1320] sm:$0xff] %vm108, %v1315
    %1322 = vst.msk [vmem:[%s1320 + $0x8] sm:$0xff] %vm108, %v1317
    %s1323 = smul.u32 %s1172, 16
    %s1324 = scalar_lea.vmem [#allocation3], %s1323
    %v1325 = vld [vmem:[%s1324] sm:$0xff]
    %v1326 = vld [vmem:[%s1324 + $0x8] sm:$0xff]
    %1329 = vrot.lane.b32.xlu0 %v1158, 80
    %v1330 = vpop.permute.xlu0 %1329
    %1331 = vrot.lane.b32.xlu0 %v1159, 80
    %v1332 = vpop.permute.xlu0 %1331
    %v1333 = vsel %vm108, %v1330, 0
    %v1335 = vsel %vm108, %v1332, 0
    %1337 = vmatprep.subr.mxu0 0.0
    %1338 = vmatpush1.msra.mxu0 0.0
    %1339 = vmatprep.subr.mxu0 0.0
    %1340 = vmatpush1.msra.mxu0 0.0
    %1341 = vmatprep.subr.mxu0 0.0
    %1342 = vmatpush1.msra.mxu0 0.0
    %1343 = vmatprep.subr.mxu0 0.0
    %1344 = vmatpush1.msra.mxu0 0.0
    %1345 = vmatprep.subr.mxu0 0.0
    %1346 = vmatpush1.msra.mxu0 0.0
    %1347 = vmatprep.subr.mxu0 0.0
    %1348 = vmatpush1.msra.mxu0 0.0
    %1349 = vmatprep.subr.mxu0 0.0
    %1350 = vmatpush1.msra.mxu0 0.0
    %1351 = vmatprep.subr.mxu0 0.0
    %1352 = vmatpush1.msra.mxu0 0.0
    %1353 = vmatprep.subr.mxu0 0.0
    %1354 = vmatpush1.msra.mxu0 0.0
    %1355 = vmatprep.subr.mxu0 0.0
    %1356 = vmatpush1.msra.mxu0 0.0
    %1357 = vmatprep.subr.mxu0 0.0
    %1358 = vmatpush1.msra.mxu0 0.0
    %1359 = vmatprep.subr.mxu0 0.0
    %1360 = vmatpush1.msra.mxu0 0.0
    %1361 = vmatprep.subr.mxu0 0.0
    %1362 = vmatpush1.msra.mxu0 0.0
    %1363 = vmatprep.subr.mxu0 0.0
    %1364 = vmatpush1.msra.mxu0 0.0
    %1365 = vmatprep.subr.mxu0 0.0
    %1366 = vmatpush1.msra.mxu0 %v1145
    %1367 = vmatprep.subr.mxu0 0.0
    %1368 = vmatpush1.msra.mxu0 %v1144
    %1369 = vmatprep.subr.mxu0 0.0
    %1370 = vmatpush2.msra.mxu0 0.0
    %1371 = vmatprep.subr.mxu0 0.0
    %1372 = vmatpush2.msra.mxu0 0.0
    %1373 = vmatprep.subr.mxu0 0.0
    %1374 = vmatpush2.msra.mxu0 0.0
    %1375 = vmatprep.subr.mxu0 0.0
    %1376 = vmatpush2.msra.mxu0 0.0
    %1377 = vmatprep.subr.mxu0 0.0
    %1378 = vmatpush2.msra.mxu0 0.0
    %1379 = vmatprep.subr.mxu0 0.0
    %1380 = vmatpush2.msra.mxu0 0.0
    %1381 = vmatprep.subr.mxu0 0.0
    %1382 = vmatpush2.msra.mxu0 0.0
    %1383 = vmatprep.subr.mxu0 0.0
    %1384 = vmatpush2.msra.mxu0 0.0
    %1385 = vmatprep.subr.mxu0 0.0
    %1386 = vmatpush2.msra.mxu0 0.0
    %1387 = vmatprep.subr.mxu0 0.0
    %1388 = vmatpush2.msra.mxu0 0.0
    %1389 = vmatprep.subr.mxu0 0.0
    %1390 = vmatpush2.msra.mxu0 0.0
    %1391 = vmatprep.subr.mxu0 0.0
    %1392 = vmatpush2.msra.mxu0 0.0
    %1393 = vmatprep.subr.mxu0 0.0
    %1394 = vmatpush2.msra.mxu0 0.0
    %1395 = vmatprep.subr.mxu0 0.0
    %1396 = vmatpush2.msra.mxu0 0.0
    %1397 = vmatprep.subr.mxu0 0.0
    %1398 = vmatpush2.msra.mxu0 0.0
    %1399 = vmatprep.subr.mxu0 0.0
    %1400 = vmatpush2.msra.mxu0 0.0
    %1401 = vmatprep.mubr.f32.mxu0 0.0
    %1402 = vmatmul.mubr.f32.gmra.mxu0 %v1333
    %v1403 = vpop.f32.mrf.mxu0
    %v1404 = vadd.f32 0.0, %v1403
    %v1405 = vpop.f32.mrf.mxu0
    %1406 = vmatprep.mubr.f32.mxu0 0.0
    %1407 = vmatmul.mubr.f32.gmra.mxu0 %v1335
    %v1408 = vpop.f32.mrf.mxu0
    %v1409 = vadd.f32 0.0, %v1408
    %v1410 = vpop.f32.mrf.mxu0
    %1411 = vdwg.mxu0
    %v1412 = vadd.f32 %v1325, %v1404
    %v1413 = vadd.f32 %v1326, %v1409
    %v1414 = vxor.u32 %v1412, 2147483648
    %v1415 = vxor.u32 %v1413, 2147483648
    %v1416 = vmul.f32 %v1414, 1.442695
    %v1417 = vpow.pop %v1416
    %v1418 = vmul.f32 %v1415, 1.442695
    %v1419 = vpow.pop %v1418
    %v1420 = vadd.f32 %v1417, 1.0
    %v1421 = vadd.f32 %v1419, 1.0
    %v1422 = vrcp.pop %v1420
    %v1423 = vmul.f32 1.0, %v1422
    %v1424 = vrcp.pop %v1421
    %v1425 = vmul.f32 1.0, %v1424
    %v1426 = vtanh.pop %v1412
    %v1427 = vtanh.pop %v1413
    %v1428 = vmul.f32 %v1423, %v1166
    %v1429 = vmul.f32 %v1425, %v1167
    %1432 = vrot.lane.b32.xlu0 %v1426, 96
    %v1433 = vpop.permute.xlu0 %1432
    %1434 = vrot.lane.b32.xlu0 %v1427, 96
    %v1435 = vpop.permute.xlu0 %1434
    %v1438 = vmul.f32 %v1423, %v1433
    %v1439 = vmul.f32 %v1425, %v1435
    %1442 = vrot.lane.b32.xlu0 %v1438, 16
    %v1443 = vpop.permute.xlu0 %1442
    %1444 = vrot.lane.b32.xlu0 %v1439, 16
    %v1445 = vpop.permute.xlu0 %1444
    %v1448 = vadd.f32 %v1428, %v1443
    %v1449 = vadd.f32 %v1429, %v1445
    %v1450 = vtanh.pop %v1448
    %v1451 = vtanh.pop %v1449
    %1454 = vrot.lane.b32.xlu0 %v1450, 32
    %v1455 = vpop.permute.xlu0 %1454
    %1456 = vrot.lane.b32.xlu0 %v1451, 32
    %v1457 = vpop.permute.xlu0 %1456
    %v1460 = vmul.f32 %v1423, %v1455
    %v1461 = vmul.f32 %v1425, %v1457
    %1464 = vrot.lane.b32.xlu0 %v1460, 80
    %v1465 = vpop.permute.xlu0 %1464
    %1466 = vrot.lane.b32.xlu0 %v1461, 80
    %v1467 = vpop.permute.xlu0 %1466
    %s1470 = scalar_lea.vmem [#allocation7], %s1323
    %1471 = vst.msk [vmem:[%s1470] sm:$0xff] %vm108, %v1465
    %1472 = vst.msk [vmem:[%s1470 + $0x8] sm:$0xff] %vm108, %v1467
    %s1473 = scalar_lea.vmem [#allocation4], %s1173
    %v1474 = vld [vmem:[%s1473] sm:$0xff]
    %v1475 = vld [vmem:[%s1473 + $0x8] sm:$0xff]
    %1478 = vrot.lane.b32.xlu0 %v1160, 80
    %v1479 = vpop.permute.xlu0 %1478
    %1480 = vrot.lane.b32.xlu0 %v1161, 80
    %v1481 = vpop.permute.xlu0 %1480
    %v1482 = vsel %vm108, %v1479, 0
    %v1484 = vsel %vm108, %v1481, 0
    %1486 = vmatprep.subr.mxu0 0.0
    %1487 = vmatpush1.msra.mxu0 0.0
    %1488 = vmatprep.subr.mxu0 0.0
    %1489 = vmatpush1.msra.mxu0 0.0
    %1490 = vmatprep.subr.mxu0 0.0
    %1491 = vmatpush1.msra.mxu0 0.0
    %1492 = vmatprep.subr.mxu0 0.0
    %1493 = vmatpush1.msra.mxu0 0.0
    %1494 = vmatprep.subr.mxu0 0.0
    %1495 = vmatpush1.msra.mxu0 0.0
    %1496 = vmatprep.subr.mxu0 0.0
    %1497 = vmatpush1.msra.mxu0 0.0
    %1498 = vmatprep.subr.mxu0 0.0
    %1499 = vmatpush1.msra.mxu0 0.0
    %1500 = vmatprep.subr.mxu0 0.0
    %1501 = vmatpush1.msra.mxu0 0.0
    %1502 = vmatprep.subr.mxu0 0.0
    %1503 = vmatpush1.msra.mxu0 0.0
    %1504 = vmatprep.subr.mxu0 0.0
    %1505 = vmatpush1.msra.mxu0 0.0
    %1506 = vmatprep.subr.mxu0 0.0
    %1507 = vmatpush1.msra.mxu0 0.0
    %1508 = vmatprep.subr.mxu0 0.0
    %1509 = vmatpush1.msra.mxu0 0.0
    %1510 = vmatprep.subr.mxu0 0.0
    %1511 = vmatpush1.msra.mxu0 0.0
    %1512 = vmatprep.subr.mxu0 0.0
    %1513 = vmatpush1.msra.mxu0 0.0
    %1514 = vmatprep.subr.mxu0 0.0
    %1515 = vmatpush1.msra.mxu0 %v1147
    %1516 = vmatprep.subr.mxu0 0.0
    %1517 = vmatpush1.msra.mxu0 %v1146
    %1518 = vmatprep.subr.mxu0 0.0
    %1519 = vmatpush2.msra.mxu0 0.0
    %1520 = vmatprep.subr.mxu0 0.0
    %1521 = vmatpush2.msra.mxu0 0.0
    %1522 = vmatprep.subr.mxu0 0.0
    %1523 = vmatpush2.msra.mxu0 0.0
    %1524 = vmatprep.subr.mxu0 0.0
    %1525 = vmatpush2.msra.mxu0 0.0
    %1526 = vmatprep.subr.mxu0 0.0
    %1527 = vmatpush2.msra.mxu0 0.0
    %1528 = vmatprep.subr.mxu0 0.0
    %1529 = vmatpush2.msra.mxu0 0.0
    %1530 = vmatprep.subr.mxu0 0.0
    %1531 = vmatpush2.msra.mxu0 0.0
    %1532 = vmatprep.subr.mxu0 0.0
    %1533 = vmatpush2.msra.mxu0 0.0
    %1534 = vmatprep.subr.mxu0 0.0
    %1535 = vmatpush2.msra.mxu0 0.0
    %1536 = vmatprep.subr.mxu0 0.0
    %1537 = vmatpush2.msra.mxu0 0.0
    %1538 = vmatprep.subr.mxu0 0.0
    %1539 = vmatpush2.msra.mxu0 0.0
    %1540 = vmatprep.subr.mxu0 0.0
    %1541 = vmatpush2.msra.mxu0 0.0
    %1542 = vmatprep.subr.mxu0 0.0
    %1543 = vmatpush2.msra.mxu0 0.0
    %1544 = vmatprep.subr.mxu0 0.0
    %1545 = vmatpush2.msra.mxu0 0.0
    %1546 = vmatprep.subr.mxu0 0.0
    %1547 = vmatpush2.msra.mxu0 0.0
    %1548 = vmatprep.subr.mxu0 0.0
    %1549 = vmatpush2.msra.mxu0 0.0
    %1550 = vmatprep.mubr.f32.mxu0 0.0
    %1551 = vmatmul.mubr.f32.gmra.mxu0 %v1482
    %v1552 = vpop.f32.mrf.mxu0
    %v1553 = vadd.f32 0.0, %v1552
    %v1554 = vpop.f32.mrf.mxu0
    %1555 = vmatprep.mubr.f32.mxu0 0.0
    %1556 = vmatmul.mubr.f32.gmra.mxu0 %v1484
    %v1557 = vpop.f32.mrf.mxu0
    %v1558 = vadd.f32 0.0, %v1557
    %v1559 = vpop.f32.mrf.mxu0
    %1560 = vdwg.mxu0
    %v1561 = vadd.f32 %v1474, %v1553
    %v1562 = vadd.f32 %v1475, %v1558
    %v1563 = vxor.u32 %v1561, 2147483648
    %v1564 = vxor.u32 %v1562, 2147483648
    %v1565 = vmul.f32 %v1563, 1.442695
    %v1566 = vpow.pop %v1565
    %v1567 = vmul.f32 %v1564, 1.442695
    %v1568 = vpow.pop %v1567
    %v1569 = vadd.f32 %v1566, 1.0
    %v1570 = vadd.f32 %v1568, 1.0
    %v1571 = vrcp.pop %v1569
    %v1572 = vmul.f32 1.0, %v1571
    %v1573 = vrcp.pop %v1570
    %v1574 = vmul.f32 1.0, %v1573
    %v1575 = vtanh.pop %v1561
    %v1576 = vtanh.pop %v1562
    %v1577 = vmul.f32 %v1572, %v1168
    %v1578 = vmul.f32 %v1574, %v1169
    %1581 = vrot.lane.b32.xlu0 %v1575, 96
    %v1582 = vpop.permute.xlu0 %1581
    %1583 = vrot.lane.b32.xlu0 %v1576, 96
    %v1584 = vpop.permute.xlu0 %1583
    %v1587 = vmul.f32 %v1572, %v1582
    %v1588 = vmul.f32 %v1574, %v1584
    %1591 = vrot.lane.b32.xlu0 %v1587, 16
    %v1592 = vpop.permute.xlu0 %1591
    %1593 = vrot.lane.b32.xlu0 %v1588, 16
    %v1594 = vpop.permute.xlu0 %1593
    %v1597 = vadd.f32 %v1577, %v1592
    %v1598 = vadd.f32 %v1578, %v1594
    %v1599 = vtanh.pop %v1597
    %v1600 = vtanh.pop %v1598
    %1603 = vrot.lane.b32.xlu0 %v1599, 32
    %v1604 = vpop.permute.xlu0 %1603
    %1605 = vrot.lane.b32.xlu0 %v1600, 32
    %v1606 = vpop.permute.xlu0 %1605
    %v1609 = vmul.f32 %v1572, %v1604
    %v1610 = vmul.f32 %v1574, %v1606
    %1613 = vrot.lane.b32.xlu0 %v1609, 80
    %v1614 = vpop.permute.xlu0 %1613
    %1615 = vrot.lane.b32.xlu0 %v1610, 80
    %v1616 = vpop.permute.xlu0 %1615
    %s1619 = scalar_lea.vmem [#allocation8], %s1173
    %1620 = vst.msk [vmem:[%s1619] sm:$0xff] %vm108, %v1614
    %1621 = vst.msk [vmem:[%s1619 + $0x8] sm:$0xff] %vm108, %v1616
    %s1622 = scalar_lea.vmem [#allocation5], %s1323
    %v1623 = vld [vmem:[%s1622] sm:$0xff]
    %v1624 = vld [vmem:[%s1622 + $0x8] sm:$0xff]
    %1627 = vrot.lane.b32.xlu0 %v1162, 80
    %v1628 = vpop.permute.xlu0 %1627
    %1629 = vrot.lane.b32.xlu0 %v1163, 80
    %v1630 = vpop.permute.xlu0 %1629
    %v1631 = vsel %vm108, %v1628, 0
    %v1633 = vsel %vm108, %v1630, 0
    %1635 = vmatprep.subr.mxu0 0.0
    %1636 = vmatpush1.msra.mxu0 0.0
    %1637 = vmatprep.subr.mxu0 0.0
    %1638 = vmatpush1.msra.mxu0 0.0
    %1639 = vmatprep.subr.mxu0 0.0
    %1640 = vmatpush1.msra.mxu0 0.0
    %1641 = vmatprep.subr.mxu0 0.0
    %1642 = vmatpush1.msra.mxu0 0.0
    %1643 = vmatprep.subr.mxu0 0.0
    %1644 = vmatpush1.msra.mxu0 0.0
    %1645 = vmatprep.subr.mxu0 0.0
    %1646 = vmatpush1.msra.mxu0 0.0
    %1647 = vmatprep.subr.mxu0 0.0
    %1648 = vmatpush1.msra.mxu0 0.0
    %1649 = vmatprep.subr.mxu0 0.0
    %1650 = vmatpush1.msra.mxu0 0.0
    %1651 = vmatprep.subr.mxu0 0.0
    %1652 = vmatpush1.msra.mxu0 0.0
    %1653 = vmatprep.subr.mxu0 0.0
    %1654 = vmatpush1.msra.mxu0 0.0
    %1655 = vmatprep.subr.mxu0 0.0
    %1656 = vmatpush1.msra.mxu0 0.0
    %1657 = vmatprep.subr.mxu0 0.0
    %1658 = vmatpush1.msra.mxu0 0.0
    %1659 = vmatprep.subr.mxu0 0.0
    %1660 = vmatpush1.msra.mxu0 0.0
    %1661 = vmatprep.subr.mxu0 0.0
    %1662 = vmatpush1.msra.mxu0 0.0
    %1663 = vmatprep.subr.mxu0 0.0
    %1664 = vmatpush1.msra.mxu0 %v1149
    %1665 = vmatprep.subr.mxu0 0.0
    %1666 = vmatpush1.msra.mxu0 %v1148
    %1667 = vmatprep.subr.mxu0 0.0
    %1668 = vmatpush2.msra.mxu0 0.0
    %1669 = vmatprep.subr.mxu0 0.0
    %1670 = vmatpush2.msra.mxu0 0.0
    %1671 = vmatprep.subr.mxu0 0.0
    %1672 = vmatpush2.msra.mxu0 0.0
    %1673 = vmatprep.subr.mxu0 0.0
    %1674 = vmatpush2.msra.mxu0 0.0
    %1675 = vmatprep.subr.mxu0 0.0
    %1676 = vmatpush2.msra.mxu0 0.0
    %1677 = vmatprep.subr.mxu0 0.0
    %1678 = vmatpush2.msra.mxu0 0.0
    %1679 = vmatprep.subr.mxu0 0.0
    %1680 = vmatpush2.msra.mxu0 0.0
    %1681 = vmatprep.subr.mxu0 0.0
    %1682 = vmatpush2.msra.mxu0 0.0
    %1683 = vmatprep.subr.mxu0 0.0
    %1684 = vmatpush2.msra.mxu0 0.0
    %1685 = vmatprep.subr.mxu0 0.0
    %1686 = vmatpush2.msra.mxu0 0.0
    %1687 = vmatprep.subr.mxu0 0.0
    %1688 = vmatpush2.msra.mxu0 0.0
    %1689 = vmatprep.subr.mxu0 0.0
    %1690 = vmatpush2.msra.mxu0 0.0
    %1691 = vmatprep.subr.mxu0 0.0
    %1692 = vmatpush2.msra.mxu0 0.0
    %1693 = vmatprep.subr.mxu0 0.0
    %1694 = vmatpush2.msra.mxu0 0.0
    %1695 = vmatprep.subr.mxu0 0.0
    %1696 = vmatpush2.msra.mxu0 0.0
    %1697 = vmatprep.subr.mxu0 0.0
    %1698 = vmatpush2.msra.mxu0 0.0
    %1699 = vmatprep.mubr.f32.mxu0 0.0
    %1700 = vmatmul.mubr.f32.gmra.mxu0 %v1631
    %v1701 = vpop.f32.mrf.mxu0
    %v1702 = vadd.f32 0.0, %v1701
    %v1703 = vpop.f32.mrf.mxu0
    %1704 = vmatprep.mubr.f32.mxu0 0.0
    %1705 = vmatmul.mubr.f32.gmra.mxu0 %v1633
    %v1706 = vpop.f32.mrf.mxu0
    %v1707 = vadd.f32 0.0, %v1706
    %v1708 = vpop.f32.mrf.mxu0
    %1709 = vdwg.mxu0
    %v1710 = vadd.f32 %v1623, %v1702
    %v1711 = vadd.f32 %v1624, %v1707
    %v1712 = vxor.u32 %v1710, 2147483648
    %v1713 = vxor.u32 %v1711, 2147483648
    %v1714 = vmul.f32 %v1712, 1.442695
    %v1715 = vpow.pop %v1714
    %v1716 = vmul.f32 %v1713, 1.442695
    %v1717 = vpow.pop %v1716
    %v1718 = vadd.f32 %v1715, 1.0
    %v1719 = vadd.f32 %v1717, 1.0
    %v1720 = vrcp.pop %v1718
    %v1721 = vmul.f32 1.0, %v1720
    %v1722 = vrcp.pop %v1719
    %v1723 = vmul.f32 1.0, %v1722
    %v1724 = vtanh.pop %v1710
    %v1725 = vtanh.pop %v1711
    %v1726 = vmul.f32 %v1721, %v1170
    %v1727 = vmul.f32 %v1723, %v1171
    %1730 = vrot.lane.b32.xlu0 %v1724, 96
    %v1731 = vpop.permute.xlu0 %1730
    %1732 = vrot.lane.b32.xlu0 %v1725, 96
    %v1733 = vpop.permute.xlu0 %1732
    %v1736 = vmul.f32 %v1721, %v1731
    %v1737 = vmul.f32 %v1723, %v1733
    %1740 = vrot.lane.b32.xlu0 %v1736, 16
    %v1741 = vpop.permute.xlu0 %1740
    %1742 = vrot.lane.b32.xlu0 %v1737, 16
    %v1743 = vpop.permute.xlu0 %1742
    %v1746 = vadd.f32 %v1726, %v1741
    %v1747 = vadd.f32 %v1727, %v1743
    %v1748 = vtanh.pop %v1746
    %v1749 = vtanh.pop %v1747
    %1752 = vrot.lane.b32.xlu0 %v1748, 32
    %v1753 = vpop.permute.xlu0 %1752
    %1754 = vrot.lane.b32.xlu0 %v1749, 32
    %v1755 = vpop.permute.xlu0 %1754
    %v1758 = vmul.f32 %v1721, %v1753
    %v1759 = vmul.f32 %v1723, %v1755
    %1762 = vrot.lane.b32.xlu0 %v1758, 80
    %v1763 = vpop.permute.xlu0 %1762
    %1764 = vrot.lane.b32.xlu0 %v1759, 80
    %v1765 = vpop.permute.xlu0 %1764
    %s1768 = scalar_lea.vmem [#allocation9], %s1323
    %1769 = vst.msk [vmem:[%s1768] sm:$0xff] %vm108, %v1763
    %1770 = vst.msk [vmem:[%s1768 + $0x8] sm:$0xff] %vm108, %v1765
  $region42: #{seqnet_forward.1} parent=0 // loop_footer
    %s1155 = sadd.s32 1, %s1151
  $region43: #{seqnet_forward.1} parent=0 // loop_footer_branch
    %1150 = sbr.rel target = $region39
  $region44: #{seqnet_forward.1} parent=0 // loop_exit
    _
  %v1771 = vld [vmem:[#allocation6] sm:$0xff]
  %v1772 = vld [vmem:[#allocation6 + $0x8] sm:$0xff]
  %v1773 = vld [vmem:[#allocation6 + $0x10] sm:$0xff]
  %v1774 = vld [vmem:[#allocation6 + $0x18] sm:$0xff]
  %v1775 = vld [vmem:[#allocation6 + $0x20] sm:$0xff]
  %v1776 = vld [vmem:[#allocation6 + $0x28] sm:$0xff]
  %v1777 = vld [vmem:[#allocation6 + $0x30] sm:$0xff]
  %v1778 = vld [vmem:[#allocation6 + $0x38] sm:$0xff]
  %v1779 = vld [vmem:[#allocation6 + $0x40] sm:$0xff]
  %v1780 = vld [vmem:[#allocation6 + $0x48] sm:$0xff]
  %v1781 = vld [vmem:[#allocation6 + $0x50] sm:$0xff]
  %v1782 = vld [vmem:[#allocation6 + $0x58] sm:$0xff]
  %v1783 = vld [vmem:[#allocation6 + $0x60] sm:$0xff]
  %v1784 = vld [vmem:[#allocation6 + $0x68] sm:$0xff]
  %v1785 = vld [vmem:[#allocation6 + $0x70] sm:$0xff]
  %v1786 = vld [vmem:[#allocation6 + $0x78] sm:$0xff]
  %v1787 = vld [vmem:[#allocation6 + $0x80] sm:$0xff]
  %v1788 = vld [vmem:[#allocation6 + $0x88] sm:$0xff]
  %v1789 = vld [vmem:[#allocation6 + $0x90] sm:$0xff]
  %v1790 = vld [vmem:[#allocation6 + $0x98] sm:$0xff]
  %v1791 = vld [vmem:[#allocation6 + $0xa0] sm:$0xff]
  %v1792 = vld [vmem:[#allocation6 + $0xa8] sm:$0xff]
  %v1793 = vld [vmem:[#allocation6 + $0xb0] sm:$0xff]
  %v1794 = vld [vmem:[#allocation6 + $0xb8] sm:$0xff]
  %v1795 = vld [vmem:[#allocation6 + $0xc0] sm:$0xff]
  %v1796 = vld [vmem:[#allocation6 + $0xc8] sm:$0xff]
  %v1797 = vld [vmem:[#allocation6 + $0xd0] sm:$0xff]
  %v1798 = vld [vmem:[#allocation6 + $0xd8] sm:$0xff]
  %v1799 = vld [vmem:[#allocation6 + $0xe0] sm:$0xff]
  %v1800 = vld [vmem:[#allocation6 + $0xe8] sm:$0xff]
  %v1801 = vld [vmem:[#allocation6 + $0xf0] sm:$0xff]
  %v1802 = vld [vmem:[#allocation6 + $0xf8] sm:$0xff]
  %v1803 = vld [vmem:[#allocation7] sm:$0xff]
  %v1804 = vld [vmem:[#allocation7 + $0x8] sm:$0xff]
  %v1805 = vld [vmem:[#allocation7 + $0x10] sm:$0xff]
  %v1806 = vld [vmem:[#allocation7 + $0x18] sm:$0xff]
  %v1807 = vld [vmem:[#allocation7 + $0x20] sm:$0xff]
  %v1808 = vld [vmem:[#allocation7 + $0x28] sm:$0xff]
  %v1809 = vld [vmem:[#allocation7 + $0x30] sm:$0xff]
  %v1810 = vld [vmem:[#allocation7 + $0x38] sm:$0xff]
  %v1811 = vld [vmem:[#allocation7 + $0x40] sm:$0xff]
  %v1812 = vld [vmem:[#allocation7 + $0x48] sm:$0xff]
  %v1813 = vld [vmem:[#allocation7 + $0x50] sm:$0xff]
  %v1814 = vld [vmem:[#allocation7 + $0x58] sm:$0xff]
  %v1815 = vld [vmem:[#allocation7 + $0x60] sm:$0xff]
  %v1816 = vld [vmem:[#allocation7 + $0x68] sm:$0xff]
  %v1817 = vld [vmem:[#allocation7 + $0x70] sm:$0xff]
  %v1818 = vld [vmem:[#allocation7 + $0x78] sm:$0xff]
  %v1819 = vld [vmem:[#allocation7 + $0x80] sm:$0xff]
  %v1820 = vld [vmem:[#allocation7 + $0x88] sm:$0xff]
  %v1821 = vld [vmem:[#allocation7 + $0x90] sm:$0xff]
  %v1822 = vld [vmem:[#allocation7 + $0x98] sm:$0xff]
  %v1823 = vld [vmem:[#allocation7 + $0xa0] sm:$0xff]
  %v1824 = vld [vmem:[#allocation7 + $0xa8] sm:$0xff]
  %v1825 = vld [vmem:[#allocation7 + $0xb0] sm:$0xff]
  %v1826 = vld [vmem:[#allocation7 + $0xb8] sm:$0xff]
  %v1827 = vld [vmem:[#allocation7 + $0xc0] sm:$0xff]
  %v1828 = vld [vmem:[#allocation7 + $0xc8] sm:$0xff]
  %v1829 = vld [vmem:[#allocation7 + $0xd0] sm:$0xff]
  %v1830 = vld [vmem:[#allocation7 + $0xd8] sm:$0xff]
  %v1831 = vld [vmem:[#allocation7 + $0xe0] sm:$0xff]
  %v1832 = vld [vmem:[#allocation7 + $0xe8] sm:$0xff]
  %v1833 = vld [vmem:[#allocation7 + $0xf0] sm:$0xff]
  %v1834 = vld [vmem:[#allocation7 + $0xf8] sm:$0xff]
  %1867 = vrot.lane.b32.xlu0 %v1803, 16
  %v1868 = vpop.permute.xlu0 %1867
  %1869 = vrot.lane.b32.xlu0 %v1804, 16
  %v1870 = vpop.permute.xlu0 %1869
  %1871 = vrot.lane.b32.xlu0 %v1805, 16
  %v1872 = vpop.permute.xlu0 %1871
  %1873 = vrot.lane.b32.xlu0 %v1806, 16
  %v1874 = vpop.permute.xlu0 %1873
  %1875 = vrot.lane.b32.xlu0 %v1807, 16
  %v1876 = vpop.permute.xlu0 %1875
  %1877 = vrot.lane.b32.xlu0 %v1808, 16
  %v1878 = vpop.permute.xlu0 %1877
  %1879 = vrot.lane.b32.xlu0 %v1809, 16
  %v1880 = vpop.permute.xlu0 %1879
  %1881 = vrot.lane.b32.xlu0 %v1810, 16
  %v1882 = vpop.permute.xlu0 %1881
  %1883 = vrot.lane.b32.xlu0 %v1811, 16
  %v1884 = vpop.permute.xlu0 %1883
  %1885 = vrot.lane.b32.xlu0 %v1812, 16
  %v1886 = vpop.permute.xlu0 %1885
  %1887 = vrot.lane.b32.xlu0 %v1813, 16
  %v1888 = vpop.permute.xlu0 %1887
  %1889 = vrot.lane.b32.xlu0 %v1814, 16
  %v1890 = vpop.permute.xlu0 %1889
  %1891 = vrot.lane.b32.xlu0 %v1815, 16
  %v1892 = vpop.permute.xlu0 %1891
  %1893 = vrot.lane.b32.xlu0 %v1816, 16
  %v1894 = vpop.permute.xlu0 %1893
  %1895 = vrot.lane.b32.xlu0 %v1817, 16
  %v1896 = vpop.permute.xlu0 %1895
  %1897 = vrot.lane.b32.xlu0 %v1818, 16
  %v1898 = vpop.permute.xlu0 %1897
  %1899 = vrot.lane.b32.xlu0 %v1819, 16
  %v1900 = vpop.permute.xlu0 %1899
  %1901 = vrot.lane.b32.xlu0 %v1820, 16
  %v1902 = vpop.permute.xlu0 %1901
  %1903 = vrot.lane.b32.xlu0 %v1821, 16
  %v1904 = vpop.permute.xlu0 %1903
  %1905 = vrot.lane.b32.xlu0 %v1822, 16
  %v1906 = vpop.permute.xlu0 %1905
  %1907 = vrot.lane.b32.xlu0 %v1823, 16
  %v1908 = vpop.permute.xlu0 %1907
  %1909 = vrot.lane.b32.xlu0 %v1824, 16
  %v1910 = vpop.permute.xlu0 %1909
  %1911 = vrot.lane.b32.xlu0 %v1825, 16
  %v1912 = vpop.permute.xlu0 %1911
  %1913 = vrot.lane.b32.xlu0 %v1826, 16
  %v1914 = vpop.permute.xlu0 %1913
  %1915 = vrot.lane.b32.xlu0 %v1827, 16
  %v1916 = vpop.permute.xlu0 %1915
  %1917 = vrot.lane.b32.xlu0 %v1828, 16
  %v1918 = vpop.permute.xlu0 %1917
  %1919 = vrot.lane.b32.xlu0 %v1829, 16
  %v1920 = vpop.permute.xlu0 %1919
  %1921 = vrot.lane.b32.xlu0 %v1830, 16
  %v1922 = vpop.permute.xlu0 %1921
  %1923 = vrot.lane.b32.xlu0 %v1831, 16
  %v1924 = vpop.permute.xlu0 %1923
  %1925 = vrot.lane.b32.xlu0 %v1832, 16
  %v1926 = vpop.permute.xlu0 %1925
  %1927 = vrot.lane.b32.xlu0 %v1833, 16
  %v1928 = vpop.permute.xlu0 %1927
  %1929 = vrot.lane.b32.xlu0 %v1834, 16
  %v1930 = vpop.permute.xlu0 %1929
  %v1963 = vsel %vm108, %v1771, %v1868
  %v1964 = vsel %vm108, %v1772, %v1870
  %v1965 = vsel %vm108, %v1773, %v1872
  %v1966 = vsel %vm108, %v1774, %v1874
  %v1967 = vsel %vm108, %v1775, %v1876
  %v1968 = vsel %vm108, %v1776, %v1878
  %v1969 = vsel %vm108, %v1777, %v1880
  %v1970 = vsel %vm108, %v1778, %v1882
  %v1971 = vsel %vm108, %v1779, %v1884
  %v1972 = vsel %vm108, %v1780, %v1886
  %v1973 = vsel %vm108, %v1781, %v1888
  %v1974 = vsel %vm108, %v1782, %v1890
  %v1975 = vsel %vm108, %v1783, %v1892
  %v1976 = vsel %vm108, %v1784, %v1894
  %v1977 = vsel %vm108, %v1785, %v1896
  %v1978 = vsel %vm108, %v1786, %v1898
  %v1979 = vsel %vm108, %v1787, %v1900
  %v1980 = vsel %vm108, %v1788, %v1902
  %v1981 = vsel %vm108, %v1789, %v1904
  %v1982 = vsel %vm108, %v1790, %v1906
  %v1983 = vsel %vm108, %v1791, %v1908
  %v1984 = vsel %vm108, %v1792, %v1910
  %v1985 = vsel %vm108, %v1793, %v1912
  %v1986 = vsel %vm108, %v1794, %v1914
  %v1987 = vsel %vm108, %v1795, %v1916
  %v1988 = vsel %vm108, %v1796, %v1918
  %v1989 = vsel %vm108, %v1797, %v1920
  %v1990 = vsel %vm108, %v1798, %v1922
  %v1991 = vsel %vm108, %v1799, %v1924
  %v1992 = vsel %vm108, %v1800, %v1926
  %v1993 = vsel %vm108, %v1801, %v1928
  %v1994 = vsel %vm108, %v1802, %v1930
  %v1995 = vld [vmem:[#allocation8] sm:$0xff]
  %v1996 = vld [vmem:[#allocation8 + $0x8] sm:$0xff]
  %v1997 = vld [vmem:[#allocation8 + $0x10] sm:$0xff]
  %v1998 = vld [vmem:[#allocation8 + $0x18] sm:$0xff]
  %v1999 = vld [vmem:[#allocation8 + $0x20] sm:$0xff]
  %v2000 = vld [vmem:[#allocation8 + $0x28] sm:$0xff]
  %v2001 = vld [vmem:[#allocation8 + $0x30] sm:$0xff]
  %v2002 = vld [vmem:[#allocation8 + $0x38] sm:$0xff]
  %v2003 = vld [vmem:[#allocation8 + $0x40] sm:$0xff]
  %v2004 = vld [vmem:[#allocation8 + $0x48] sm:$0xff]
  %v2005 = vld [vmem:[#allocation8 + $0x50] sm:$0xff]
  %v2006 = vld [vmem:[#allocation8 + $0x58] sm:$0xff]
  %v2007 = vld [vmem:[#allocation8 + $0x60] sm:$0xff]
  %v2008 = vld [vmem:[#allocation8 + $0x68] sm:$0xff]
  %v2009 = vld [vmem:[#allocation8 + $0x70] sm:$0xff]
  %v2010 = vld [vmem:[#allocation8 + $0x78] sm:$0xff]
  %v2011 = vld [vmem:[#allocation8 + $0x80] sm:$0xff]
  %v2012 = vld [vmem:[#allocation8 + $0x88] sm:$0xff]
  %v2013 = vld [vmem:[#allocation8 + $0x90] sm:$0xff]
  %v2014 = vld [vmem:[#allocation8 + $0x98] sm:$0xff]
  %v2015 = vld [vmem:[#allocation8 + $0xa0] sm:$0xff]
  %v2016 = vld [vmem:[#allocation8 + $0xa8] sm:$0xff]
  %v2017 = vld [vmem:[#allocation8 + $0xb0] sm:$0xff]
  %v2018 = vld [vmem:[#allocation8 + $0xb8] sm:$0xff]
  %v2019 = vld [vmem:[#allocation8 + $0xc0] sm:$0xff]
  %v2020 = vld [vmem:[#allocation8 + $0xc8] sm:$0xff]
  %v2021 = vld [vmem:[#allocation8 + $0xd0] sm:$0xff]
  %v2022 = vld [vmem:[#allocation8 + $0xd8] sm:$0xff]
  %v2023 = vld [vmem:[#allocation8 + $0xe0] sm:$0xff]
  %v2024 = vld [vmem:[#allocation8 + $0xe8] sm:$0xff]
  %v2025 = vld [vmem:[#allocation8 + $0xf0] sm:$0xff]
  %v2026 = vld [vmem:[#allocation8 + $0xf8] sm:$0xff]
  %v2027 = vld [vmem:[#allocation9] sm:$0xff]
  %v2028 = vld [vmem:[#allocation9 + $0x8] sm:$0xff]
  %v2029 = vld [vmem:[#allocation9 + $0x10] sm:$0xff]
  %v2030 = vld [vmem:[#allocation9 + $0x18] sm:$0xff]
  %v2031 = vld [vmem:[#allocation9 + $0x20] sm:$0xff]
  %v2032 = vld [vmem:[#allocation9 + $0x28] sm:$0xff]
  %v2033 = vld [vmem:[#allocation9 + $0x30] sm:$0xff]
  %v2034 = vld [vmem:[#allocation9 + $0x38] sm:$0xff]
  %v2035 = vld [vmem:[#allocation9 + $0x40] sm:$0xff]
  %v2036 = vld [vmem:[#allocation9 + $0x48] sm:$0xff]
  %v2037 = vld [vmem:[#allocation9 + $0x50] sm:$0xff]
  %v2038 = vld [vmem:[#allocation9 + $0x58] sm:$0xff]
  %v2039 = vld [vmem:[#allocation9 + $0x60] sm:$0xff]
  %v2040 = vld [vmem:[#allocation9 + $0x68] sm:$0xff]
  %v2041 = vld [vmem:[#allocation9 + $0x70] sm:$0xff]
  %v2042 = vld [vmem:[#allocation9 + $0x78] sm:$0xff]
  %v2043 = vld [vmem:[#allocation9 + $0x80] sm:$0xff]
  %v2044 = vld [vmem:[#allocation9 + $0x88] sm:$0xff]
  %v2045 = vld [vmem:[#allocation9 + $0x90] sm:$0xff]
  %v2046 = vld [vmem:[#allocation9 + $0x98] sm:$0xff]
  %v2047 = vld [vmem:[#allocation9 + $0xa0] sm:$0xff]
  %v2048 = vld [vmem:[#allocation9 + $0xa8] sm:$0xff]
  %v2049 = vld [vmem:[#allocation9 + $0xb0] sm:$0xff]
  %v2050 = vld [vmem:[#allocation9 + $0xb8] sm:$0xff]
  %v2051 = vld [vmem:[#allocation9 + $0xc0] sm:$0xff]
  %v2052 = vld [vmem:[#allocation9 + $0xc8] sm:$0xff]
  %v2053 = vld [vmem:[#allocation9 + $0xd0] sm:$0xff]
  %v2054 = vld [vmem:[#allocation9 + $0xd8] sm:$0xff]
  %v2055 = vld [vmem:[#allocation9 + $0xe0] sm:$0xff]
  %v2056 = vld [vmem:[#allocation9 + $0xe8] sm:$0xff]
  %v2057 = vld [vmem:[#allocation9 + $0xf0] sm:$0xff]
  %v2058 = vld [vmem:[#allocation9 + $0xf8] sm:$0xff]
  %2091 = vrot.lane.b32.xlu0 %v2027, 16
  %v2092 = vpop.permute.xlu0 %2091
  %2093 = vrot.lane.b32.xlu0 %v2028, 16
  %v2094 = vpop.permute.xlu0 %2093
  %2095 = vrot.lane.b32.xlu0 %v2029, 16
  %v2096 = vpop.permute.xlu0 %2095
  %2097 = vrot.lane.b32.xlu0 %v2030, 16
  %v2098 = vpop.permute.xlu0 %2097
  %2099 = vrot.lane.b32.xlu0 %v2031, 16
  %v2100 = vpop.permute.xlu0 %2099
  %2101 = vrot.lane.b32.xlu0 %v2032, 16
  %v2102 = vpop.permute.xlu0 %2101
  %2103 = vrot.lane.b32.xlu0 %v2033, 16
  %v2104 = vpop.permute.xlu0 %2103
  %2105 = vrot.lane.b32.xlu0 %v2034, 16
  %v2106 = vpop.permute.xlu0 %2105
  %2107 = vrot.lane.b32.xlu0 %v2035, 16
  %v2108 = vpop.permute.xlu0 %2107
  %2109 = vrot.lane.b32.xlu0 %v2036, 16
  %v2110 = vpop.permute.xlu0 %2109
  %2111 = vrot.lane.b32.xlu0 %v2037, 16
  %v2112 = vpop.permute.xlu0 %2111
  %2113 = vrot.lane.b32.xlu0 %v2038, 16
  %v2114 = vpop.permute.xlu0 %2113
  %2115 = vrot.lane.b32.xlu0 %v2039, 16
  %v2116 = vpop.permute.xlu0 %2115
  %2117 = vrot.lane.b32.xlu0 %v2040, 16
  %v2118 = vpop.permute.xlu0 %2117
  %2119 = vrot.lane.b32.xlu0 %v2041, 16
  %v2120 = vpop.permute.xlu0 %2119
  %2121 = vrot.lane.b32.xlu0 %v2042, 16
  %v2122 = vpop.permute.xlu0 %2121
  %2123 = vrot.lane.b32.xlu0 %v2043, 16
  %v2124 = vpop.permute.xlu0 %2123
  %2125 = vrot.lane.b32.xlu0 %v2044, 16
  %v2126 = vpop.permute.xlu0 %2125
  %2127 = vrot.lane.b32.xlu0 %v2045, 16
  %v2128 = vpop.permute.xlu0 %2127
  %2129 = vrot.lane.b32.xlu0 %v2046, 16
  %v2130 = vpop.permute.xlu0 %2129
  %2131 = vrot.lane.b32.xlu0 %v2047, 16
  %v2132 = vpop.permute.xlu0 %2131
  %2133 = vrot.lane.b32.xlu0 %v2048, 16
  %v2134 = vpop.permute.xlu0 %2133
  %2135 = vrot.lane.b32.xlu0 %v2049, 16
  %v2136 = vpop.permute.xlu0 %2135
  %2137 = vrot.lane.b32.xlu0 %v2050, 16
  %v2138 = vpop.permute.xlu0 %2137
  %2139 = vrot.lane.b32.xlu0 %v2051, 16
  %v2140 = vpop.permute.xlu0 %2139
  %2141 = vrot.lane.b32.xlu0 %v2052, 16
  %v2142 = vpop.permute.xlu0 %2141
  %2143 = vrot.lane.b32.xlu0 %v2053, 16
  %v2144 = vpop.permute.xlu0 %2143
  %2145 = vrot.lane.b32.xlu0 %v2054, 16
  %v2146 = vpop.permute.xlu0 %2145
  %2147 = vrot.lane.b32.xlu0 %v2055, 16
  %v2148 = vpop.permute.xlu0 %2147
  %2149 = vrot.lane.b32.xlu0 %v2056, 16
  %v2150 = vpop.permute.xlu0 %2149
  %2151 = vrot.lane.b32.xlu0 %v2057, 16
  %v2152 = vpop.permute.xlu0 %2151
  %2153 = vrot.lane.b32.xlu0 %v2058, 16
  %v2154 = vpop.permute.xlu0 %2153
  %v2187 = vsel %vm108, %v1995, %v2092
  %v2188 = vsel %vm108, %v1996, %v2094
  %v2189 = vsel %vm108, %v1997, %v2096
  %v2190 = vsel %vm108, %v1998, %v2098
  %v2191 = vsel %vm108, %v1999, %v2100
  %v2192 = vsel %vm108, %v2000, %v2102
  %v2193 = vsel %vm108, %v2001, %v2104
  %v2194 = vsel %vm108, %v2002, %v2106
  %v2195 = vsel %vm108, %v2003, %v2108
  %v2196 = vsel %vm108, %v2004, %v2110
  %v2197 = vsel %vm108, %v2005, %v2112
  %v2198 = vsel %vm108, %v2006, %v2114
  %v2199 = vsel %vm108, %v2007, %v2116
  %v2200 = vsel %vm108, %v2008, %v2118
  %v2201 = vsel %vm108, %v2009, %v2120
  %v2202 = vsel %vm108, %v2010, %v2122
  %v2203 = vsel %vm108, %v2011, %v2124
  %v2204 = vsel %vm108, %v2012, %v2126
  %v2205 = vsel %vm108, %v2013, %v2128
  %v2206 = vsel %vm108, %v2014, %v2130
  %v2207 = vsel %vm108, %v2015, %v2132
  %v2208 = vsel %vm108, %v2016, %v2134
  %v2209 = vsel %vm108, %v2017, %v2136
  %v2210 = vsel %vm108, %v2018, %v2138
  %v2211 = vsel %vm108, %v2019, %v2140
  %v2212 = vsel %vm108, %v2020, %v2142
  %v2213 = vsel %vm108, %v2021, %v2144
  %v2214 = vsel %vm108, %v2022, %v2146
  %v2215 = vsel %vm108, %v2023, %v2148
  %v2216 = vsel %vm108, %v2024, %v2150
  %v2217 = vsel %vm108, %v2025, %v2152
  %v2218 = vsel %vm108, %v2026, %v2154
  %v2219 = vld [vmem:[%s5] sm:$0xff]
  %v2220 = vld [vmem:[%s5 + $0x8] sm:$0xff]
  %2223 = vrot.lane.b32.xlu0 %v2219, 96
  %v2224 = vpop.permute.xlu0 %2223
  %2225 = vrot.lane.b32.xlu0 %v2220, 96
  %v2226 = vpop.permute.xlu0 %2225
  %vm2227 = vcmask 261120
  %v2228 = vsel %vm2227, %v2224, 0
  %v2230 = vsel %vm2227, %v2226, 0
  %v2233 = vsel %vm2227, %v2187, 0
  %v2236 = vsel %vm2227, %v2188, 0
  %v2239 = vsel %vm2227, %v2189, 0
  %v2242 = vsel %vm2227, %v2190, 0
  %v2245 = vsel %vm2227, %v2191, 0
  %v2248 = vsel %vm2227, %v2192, 0
  %v2251 = vsel %vm2227, %v2193, 0
  %v2254 = vsel %vm2227, %v2194, 0
  %v2257 = vsel %vm2227, %v2195, 0
  %v2260 = vsel %vm2227, %v2196, 0
  %v2263 = vsel %vm2227, %v2197, 0
  %v2266 = vsel %vm2227, %v2198, 0
  %v2269 = vsel %vm2227, %v2199, 0
  %v2272 = vsel %vm2227, %v2200, 0
  %v2275 = vsel %vm2227, %v2201, 0
  %v2278 = vsel %vm2227, %v2202, 0
  %v2281 = vsel %vm2227, %v2203, 0
  %v2284 = vsel %vm2227, %v2204, 0
  %v2287 = vsel %vm2227, %v2205, 0
  %v2290 = vsel %vm2227, %v2206, 0
  %v2293 = vsel %vm2227, %v2207, 0
  %v2296 = vsel %vm2227, %v2208, 0
  %v2299 = vsel %vm2227, %v2209, 0
  %v2302 = vsel %vm2227, %v2210, 0
  %v2305 = vsel %vm2227, %v2211, 0
  %v2308 = vsel %vm2227, %v2212, 0
  %v2311 = vsel %vm2227, %v2213, 0
  %v2314 = vsel %vm2227, %v2214, 0
  %v2317 = vsel %vm2227, %v2215, 0
  %v2320 = vsel %vm2227, %v2216, 0
  %v2323 = vsel %vm2227, %v2217, 0
  %v2326 = vsel %vm2227, %v2218, 0
  %2328 = vmatprep.subr.mxu0 0.0
  %2329 = vmatpush1.xpose.msra.mxu0 %v2278
  %2330 = vmatprep.subr.mxu0 0.0
  %2331 = vmatpush1.xpose.msra.mxu0 %v2275
  %2332 = vmatprep.subr.mxu0 0.0
  %2333 = vmatpush1.xpose.msra.mxu0 %v2272
  %2334 = vmatprep.subr.mxu0 0.0
  %2335 = vmatpush1.xpose.msra.mxu0 %v2269
  %2336 = vmatprep.subr.mxu0 0.0
  %2337 = vmatpush1.xpose.msra.mxu0 %v2266
  %2338 = vmatprep.subr.mxu0 0.0
  %2339 = vmatpush1.xpose.msra.mxu0 %v2263
  %2340 = vmatprep.subr.mxu0 0.0
  %2341 = vmatpush1.xpose.msra.mxu0 %v2260
  %2342 = vmatprep.subr.mxu0 0.0
  %2343 = vmatpush1.xpose.msra.mxu0 %v2257
  %2344 = vmatprep.subr.mxu0 0.0
  %2345 = vmatpush1.xpose.msra.mxu0 %v2254
  %2346 = vmatprep.subr.mxu0 0.0
  %2347 = vmatpush1.xpose.msra.mxu0 %v2251
  %2348 = vmatprep.subr.mxu0 0.0
  %2349 = vmatpush1.xpose.msra.mxu0 %v2248
  %2350 = vmatprep.subr.mxu0 0.0
  %2351 = vmatpush1.xpose.msra.mxu0 %v2245
  %2352 = vmatprep.subr.mxu0 0.0
  %2353 = vmatpush1.xpose.msra.mxu0 %v2242
  %2354 = vmatprep.subr.mxu0 0.0
  %2355 = vmatpush1.xpose.msra.mxu0 %v2239
  %2356 = vmatprep.subr.mxu0 0.0
  %2357 = vmatpush1.xpose.msra.mxu0 %v2236
  %2358 = vmatprep.subr.mxu0 0.0
  %2359 = vmatpush1.xpose.msra.mxu0 %v2233
  %2360 = vmatprep.subr.mxu0 0.0
  %2361 = vmatpush2.xpose.msra.mxu0 %v2326
  %2362 = vmatprep.subr.mxu0 0.0
  %2363 = vmatpush2.xpose.msra.mxu0 %v2323
  %2364 = vmatprep.subr.mxu0 0.0
  %2365 = vmatpush2.xpose.msra.mxu0 %v2320
  %2366 = vmatprep.subr.mxu0 0.0
  %2367 = vmatpush2.xpose.msra.mxu0 %v2317
  %2368 = vmatprep.subr.mxu0 0.0
  %2369 = vmatpush2.xpose.msra.mxu0 %v2314
  %2370 = vmatprep.subr.mxu0 0.0
  %2371 = vmatpush2.xpose.msra.mxu0 %v2311
  %2372 = vmatprep.subr.mxu0 0.0
  %2373 = vmatpush2.xpose.msra.mxu0 %v2308
  %2374 = vmatprep.subr.mxu0 0.0
  %2375 = vmatpush2.xpose.msra.mxu0 %v2305
  %2376 = vmatprep.subr.mxu0 0.0
  %2377 = vmatpush2.xpose.msra.mxu0 %v2302
  %2378 = vmatprep.subr.mxu0 0.0
  %2379 = vmatpush2.xpose.msra.mxu0 %v2299
  %2380 = vmatprep.subr.mxu0 0.0
  %2381 = vmatpush2.xpose.msra.mxu0 %v2296
  %2382 = vmatprep.subr.mxu0 0.0
  %2383 = vmatpush2.xpose.msra.mxu0 %v2293
  %2384 = vmatprep.subr.mxu0 0.0
  %2385 = vmatpush2.xpose.msra.mxu0 %v2290
  %2386 = vmatprep.subr.mxu0 0.0
  %2387 = vmatpush2.xpose.msra.mxu0 %v2287
  %2388 = vmatprep.subr.mxu0 0.0
  %2389 = vmatpush2.xpose.msra.mxu0 %v2284
  %2390 = vmatprep.subr.mxu0 0.0
  %2391 = vmatpush2.xpose.msra.mxu0 %v2281
  %2392 = vmatprep.mubr.f32.mxu0 0.0
  %2393 = vmatmul.mubr.f32.gmra.mxu0 %v2228
  %v2394 = vpop.f32.mrf.mxu0
  %v2395 = vadd.f32 0.0, %v2394
  %v2396 = vpop.f32.mrf.mxu0
  %v2397 = vadd.f32 0.0, %v2396
  %2398 = vmatprep.mubr.f32.mxu0 0.0
  %2399 = vmatmul.mubr.f32.gmra.mxu0 %v2230
  %v2400 = vpop.f32.mrf.mxu0
  %v2401 = vadd.f32 0.0, %v2400
  %v2402 = vpop.f32.mrf.mxu0
  %v2403 = vadd.f32 0.0, %v2402
  %2404 = vdwg.mxu0
  %v2405 = vld [vmem:[%s8] sm:$0xff]
  %v2406 = vld [vmem:[%s8 + $0x8] sm:$0xff]
  %v2407 = vld [vmem:[%s8 + $0x10] sm:$0xff]
  %v2408 = vld [vmem:[%s8 + $0x18] sm:$0xff]
  %v2409 = vld [vmem:[%s8 + $0x20] sm:$0xff]
  %v2410 = vld [vmem:[%s8 + $0x28] sm:$0xff]
  %v2411 = vld [vmem:[%s8 + $0x30] sm:$0xff]
  %v2412 = vld [vmem:[%s8 + $0x38] sm:$0xff]
  %v2413 = vld [vmem:[%s8 + $0x40] sm:$0xff]
  %v2414 = vld [vmem:[%s8 + $0x48] sm:$0xff]
  %v2415 = vld [vmem:[%s8 + $0x50] sm:$0xff]
  %v2416 = vld [vmem:[%s8 + $0x58] sm:$0xff]
  %v2417 = vld [vmem:[%s8 + $0x60] sm:$0xff]
  %v2418 = vld [vmem:[%s8 + $0x68] sm:$0xff]
  %v2419 = vld [vmem:[%s8 + $0x70] sm:$0xff]
  %v2420 = vld [vmem:[%s8 + $0x78] sm:$0xff]
  %v2421 = vld [vmem:[%s8 + $0x80] sm:$0xff]
  %v2422 = vld [vmem:[%s8 + $0x88] sm:$0xff]
  %v2423 = vld [vmem:[%s8 + $0x90] sm:$0xff]
  %v2424 = vld [vmem:[%s8 + $0x98] sm:$0xff]
  %v2425 = vld [vmem:[%s8 + $0xa0] sm:$0xff]
  %v2426 = vld [vmem:[%s8 + $0xa8] sm:$0xff]
  %v2427 = vld [vmem:[%s8 + $0xb0] sm:$0xff]
  %v2428 = vld [vmem:[%s8 + $0xb8] sm:$0xff]
  %v2429 = vld [vmem:[%s8 + $0xc0] sm:$0xff]
  %v2430 = vld [vmem:[%s8 + $0xc8] sm:$0xff]
  %v2431 = vld [vmem:[%s8 + $0xd0] sm:$0xff]
  %v2432 = vld [vmem:[%s8 + $0xd8] sm:$0xff]
  %v2433 = vld [vmem:[%s8 + $0xe0] sm:$0xff]
  %v2434 = vld [vmem:[%s8 + $0xe8] sm:$0xff]
  %v2435 = vld [vmem:[%s8 + $0xf0] sm:$0xff]
  %v2436 = vld [vmem:[%s8 + $0xf8] sm:$0xff]
  %v2437 = vld [vmem:[%s8 + $0x100] sm:$0xff]
  %v2438 = vld [vmem:[%s8 + $0x108] sm:$0xff]
  %v2439 = vld [vmem:[%s8 + $0x110] sm:$0xff]
  %v2440 = vld [vmem:[%s8 + $0x118] sm:$0xff]
  %v2441 = vld [vmem:[%s8 + $0x120] sm:$0xff]
  %v2442 = vld [vmem:[%s8 + $0x128] sm:$0xff]
  %v2443 = vld [vmem:[%s8 + $0x130] sm:$0xff]
  %v2444 = vld [vmem:[%s8 + $0x138] sm:$0xff]
  %v2445 = vld [vmem:[%s8 + $0x140] sm:$0xff]
  %v2446 = vld [vmem:[%s8 + $0x148] sm:$0xff]
  %v2447 = vld [vmem:[%s8 + $0x150] sm:$0xff]
  %v2448 = vld [vmem:[%s8 + $0x158] sm:$0xff]
  %v2449 = vld [vmem:[%s8 + $0x160] sm:$0xff]
  %v2450 = vld [vmem:[%s8 + $0x168] sm:$0xff]
  %v2451 = vld [vmem:[%s8 + $0x170] sm:$0xff]
  %v2452 = vld [vmem:[%s8 + $0x178] sm:$0xff]
  %v2453 = vld [vmem:[%s8 + $0x180] sm:$0xff]
  %v2454 = vld [vmem:[%s8 + $0x188] sm:$0xff]
  %v2455 = vld [vmem:[%s8 + $0x190] sm:$0xff]
  %v2456 = vld [vmem:[%s8 + $0x198] sm:$0xff]
  %v2457 = vld [vmem:[%s8 + $0x1a0] sm:$0xff]
  %v2458 = vld [vmem:[%s8 + $0x1a8] sm:$0xff]
  %v2459 = vld [vmem:[%s8 + $0x1b0] sm:$0xff]
  %v2460 = vld [vmem:[%s8 + $0x1b8] sm:$0xff]
  %v2461 = vld [vmem:[%s8 + $0x1c0] sm:$0xff]
  %v2462 = vld [vmem:[%s8 + $0x1c8] sm:$0xff]
  %v2463 = vld [vmem:[%s8 + $0x1d0] sm:$0xff]
  %v2464 = vld [vmem:[%s8 + $0x1d8] sm:$0xff]
  %v2465 = vld [vmem:[%s8 + $0x1e0] sm:$0xff]
  %v2466 = vld [vmem:[%s8 + $0x1e8] sm:$0xff]
  %v2467 = vld [vmem:[%s8 + $0x1f0] sm:$0xff]
  %v2468 = vld [vmem:[%s8 + $0x1f8] sm:$0xff]
  %2469 = vmatprep.subr.mxu0 %v2436
  %2470 = vmatpush1.msra.mxu0 %v2435
  %2471 = vmatprep.subr.mxu0 %v2434
  %2472 = vmatpush1.msra.mxu0 %v2433
  %2473 = vmatprep.subr.mxu0 %v2432
  %2474 = vmatpush1.msra.mxu0 %v2431
  %2475 = vmatprep.subr.mxu0 %v2430
  %2476 = vmatpush1.msra.mxu0 %v2429
  %2477 = vmatprep.subr.mxu0 %v2428
  %2478 = vmatpush1.msra.mxu0 %v2427
  %2479 = vmatprep.subr.mxu0 %v2426
  %2480 = vmatpush1.msra.mxu0 %v2425
  %2481 = vmatprep.subr.mxu0 %v2424
  %2482 = vmatpush1.msra.mxu0 %v2423
  %2483 = vmatprep.subr.mxu0 %v2422
  %2484 = vmatpush1.msra.mxu0 %v2421
  %2485 = vmatprep.subr.mxu0 %v2420
  %2486 = vmatpush1.msra.mxu0 %v2419
  %2487 = vmatprep.subr.mxu0 %v2418
  %2488 = vmatpush1.msra.mxu0 %v2417
  %2489 = vmatprep.subr.mxu0 %v2416
  %2490 = vmatpush1.msra.mxu0 %v2415
  %2491 = vmatprep.subr.mxu0 %v2414
  %2492 = vmatpush1.msra.mxu0 %v2413
  %2493 = vmatprep.subr.mxu0 %v2412
  %2494 = vmatpush1.msra.mxu0 %v2411
  %2495 = vmatprep.subr.mxu0 %v2410
  %2496 = vmatpush1.msra.mxu0 %v2409
  %2497 = vmatprep.subr.mxu0 %v2408
  %2498 = vmatpush1.msra.mxu0 %v2407
  %2499 = vmatprep.subr.mxu0 %v2406
  %2500 = vmatpush1.msra.mxu0 %v2405
  %2501 = vmatprep.subr.mxu0 %v2468
  %2502 = vmatpush2.msra.mxu0 %v2467
  %2503 = vmatprep.subr.mxu0 %v2466
  %2504 = vmatpush2.msra.mxu0 %v2465
  %2505 = vmatprep.subr.mxu0 %v2464
  %2506 = vmatpush2.msra.mxu0 %v2463
  %2507 = vmatprep.subr.mxu0 %v2462
  %2508 = vmatpush2.msra.mxu0 %v2461
  %2509 = vmatprep.subr.mxu0 %v2460
  %2510 = vmatpush2.msra.mxu0 %v2459
  %2511 = vmatprep.subr.mxu0 %v2458
  %2512 = vmatpush2.msra.mxu0 %v2457
  %2513 = vmatprep.subr.mxu0 %v2456
  %2514 = vmatpush2.msra.mxu0 %v2455
  %2515 = vmatprep.subr.mxu0 %v2454
  %2516 = vmatpush2.msra.mxu0 %v2453
  %2517 = vmatprep.subr.mxu0 %v2452
  %2518 = vmatpush2.msra.mxu0 %v2451
  %2519 = vmatprep.subr.mxu0 %v2450
  %2520 = vmatpush2.msra.mxu0 %v2449
  %2521 = vmatprep.subr.mxu0 %v2448
  %2522 = vmatpush2.msra.mxu0 %v2447
  %2523 = vmatprep.subr.mxu0 %v2446
  %2524 = vmatpush2.msra.mxu0 %v2445
  %2525 = vmatprep.subr.mxu0 %v2444
  %2526 = vmatpush2.msra.mxu0 %v2443
  %2527 = vmatprep.subr.mxu0 %v2442
  %2528 = vmatpush2.msra.mxu0 %v2441
  %2529 = vmatprep.subr.mxu0 %v2440
  %2530 = vmatpush2.msra.mxu0 %v2439
  %2531 = vmatprep.subr.mxu0 %v2438
  %2532 = vmatpush2.msra.mxu0 %v2437
  %2533 = vmatprep.mubr.f32.mxu0 %v2397
  %2534 = vmatmul.mubr.f32.gmra.mxu0 %v2395
  %v2535 = vpop.f32.mrf.mxu0
  %v2536 = vadd.f32 0.0, %v2535
  %v2537 = vpop.f32.mrf.mxu0
  %v2538 = vadd.f32 0.0, %v2537
  %2539 = vmatprep.mubr.f32.mxu0 %v2403
  %2540 = vmatmul.mubr.f32.gmra.mxu0 %v2401
  %v2541 = vpop.f32.mrf.mxu0
  %v2542 = vadd.f32 0.0, %v2541
  %v2543 = vpop.f32.mrf.mxu0
  %v2544 = vadd.f32 0.0, %v2543
  %2545 = vdwg.mxu0
  %v2546 = vsel %vm2227, %v2219, 0
  %v2548 = vsel %vm2227, %v2220, 0
  %v2551 = vsel %vm2227, %v1963, 0
  %v2554 = vsel %vm2227, %v1964, 0
  %v2557 = vsel %vm2227, %v1965, 0
  %v2560 = vsel %vm2227, %v1966, 0
  %v2563 = vsel %vm2227, %v1967, 0
  %v2566 = vsel %vm2227, %v1968, 0
  %v2569 = vsel %vm2227, %v1969, 0
  %v2572 = vsel %vm2227, %v1970, 0
  %v2575 = vsel %vm2227, %v1971, 0
  %v2578 = vsel %vm2227, %v1972, 0
  %v2581 = vsel %vm2227, %v1973, 0
  %v2584 = vsel %vm2227, %v1974, 0
  %v2587 = vsel %vm2227, %v1975, 0
  %v2590 = vsel %vm2227, %v1976, 0
  %v2593 = vsel %vm2227, %v1977, 0
  %v2596 = vsel %vm2227, %v1978, 0
  %v2599 = vsel %vm2227, %v1979, 0
  %v2602 = vsel %vm2227, %v1980, 0
  %v2605 = vsel %vm2227, %v1981, 0
  %v2608 = vsel %vm2227, %v1982, 0
  %v2611 = vsel %vm2227, %v1983, 0
  %v2614 = vsel %vm2227, %v1984, 0
  %v2617 = vsel %vm2227, %v1985, 0
  %v2620 = vsel %vm2227, %v1986, 0
  %v2623 = vsel %vm2227, %v1987, 0
  %v2626 = vsel %vm2227, %v1988, 0
  %v2629 = vsel %vm2227, %v1989, 0
  %v2632 = vsel %vm2227, %v1990, 0
  %v2635 = vsel %vm2227, %v1991, 0
  %v2638 = vsel %vm2227, %v1992, 0
  %v2641 = vsel %vm2227, %v1993, 0
  %v2644 = vsel %vm2227, %v1994, 0
  %2646 = vmatprep.subr.mxu0 0.0
  %2647 = vmatpush1.xpose.msra.mxu0 %v2596
  %2648 = vmatprep.subr.mxu0 0.0
  %2649 = vmatpush1.xpose.msra.mxu0 %v2593
  %2650 = vmatprep.subr.mxu0 0.0
  %2651 = vmatpush1.xpose.msra.mxu0 %v2590
  %2652 = vmatprep.subr.mxu0 0.0
  %2653 = vmatpush1.xpose.msra.mxu0 %v2587
  %2654 = vmatprep.subr.mxu0 0.0
  %2655 = vmatpush1.xpose.msra.mxu0 %v2584
  %2656 = vmatprep.subr.mxu0 0.0
  %2657 = vmatpush1.xpose.msra.mxu0 %v2581
  %2658 = vmatprep.subr.mxu0 0.0
  %2659 = vmatpush1.xpose.msra.mxu0 %v2578
  %2660 = vmatprep.subr.mxu0 0.0
  %2661 = vmatpush1.xpose.msra.mxu0 %v2575
  %2662 = vmatprep.subr.mxu0 0.0
  %2663 = vmatpush1.xpose.msra.mxu0 %v2572
  %2664 = vmatprep.subr.mxu0 0.0
  %2665 = vmatpush1.xpose.msra.mxu0 %v2569
  %2666 = vmatprep.subr.mxu0 0.0
  %2667 = vmatpush1.xpose.msra.mxu0 %v2566
  %2668 = vmatprep.subr.mxu0 0.0
  %2669 = vmatpush1.xpose.msra.mxu0 %v2563
  %2670 = vmatprep.subr.mxu0 0.0
  %2671 = vmatpush1.xpose.msra.mxu0 %v2560
  %2672 = vmatprep.subr.mxu0 0.0
  %2673 = vmatpush1.xpose.msra.mxu0 %v2557
  %2674 = vmatprep.subr.mxu0 0.0
  %2675 = vmatpush1.xpose.msra.mxu0 %v2554
  %2676 = vmatprep.subr.mxu0 0.0
  %2677 = vmatpush1.xpose.msra.mxu0 %v2551
  %2678 = vmatprep.subr.mxu0 0.0
  %2679 = vmatpush2.xpose.msra.mxu0 %v2644
  %2680 = vmatprep.subr.mxu0 0.0
  %2681 = vmatpush2.xpose.msra.mxu0 %v2641
  %2682 = vmatprep.subr.mxu0 0.0
  %2683 = vmatpush2.xpose.msra.mxu0 %v2638
  %2684 = vmatprep.subr.mxu0 0.0
  %2685 = vmatpush2.xpose.msra.mxu0 %v2635
  %2686 = vmatprep.subr.mxu0 0.0
  %2687 = vmatpush2.xpose.msra.mxu0 %v2632
  %2688 = vmatprep.subr.mxu0 0.0
  %2689 = vmatpush2.xpose.msra.mxu0 %v2629
  %2690 = vmatprep.subr.mxu0 0.0
  %2691 = vmatpush2.xpose.msra.mxu0 %v2626
  %2692 = vmatprep.subr.mxu0 0.0
  %2693 = vmatpush2.xpose.msra.mxu0 %v2623
  %2694 = vmatprep.subr.mxu0 0.0
  %2695 = vmatpush2.xpose.msra.mxu0 %v2620
  %2696 = vmatprep.subr.mxu0 0.0
  %2697 = vmatpush2.xpose.msra.mxu0 %v2617
  %2698 = vmatprep.subr.mxu0 0.0
  %2699 = vmatpush2.xpose.msra.mxu0 %v2614
  %2700 = vmatprep.subr.mxu0 0.0
  %2701 = vmatpush2.xpose.msra.mxu0 %v2611
  %2702 = vmatprep.subr.mxu0 0.0
  %2703 = vmatpush2.xpose.msra.mxu0 %v2608
  %2704 = vmatprep.subr.mxu0 0.0
  %2705 = vmatpush2.xpose.msra.mxu0 %v2605
  %2706 = vmatprep.subr.mxu0 0.0
  %2707 = vmatpush2.xpose.msra.mxu0 %v2602
  %2708 = vmatprep.subr.mxu0 0.0
  %2709 = vmatpush2.xpose.msra.mxu0 %v2599
  %2710 = vmatprep.mubr.f32.mxu0 0.0
  %2711 = vmatmul.mubr.f32.gmra.mxu0 %v2546
  %v2712 = vpop.f32.mrf.mxu0
  %v2713 = vadd.f32 %v2536, %v2712
  %v2714 = vpop.f32.mrf.mxu0
  %v2715 = vadd.f32 %v2538, %v2714
  %2716 = vmatprep.mubr.f32.mxu0 0.0
  %2717 = vmatmul.mubr.f32.gmra.mxu0 %v2548
  %v2718 = vpop.f32.mrf.mxu0
  %v2719 = vadd.f32 %v2542, %v2718
  %v2720 = vpop.f32.mrf.mxu0
  %v2721 = vadd.f32 %v2544, %v2720
  %2722 = vdwg.mxu0
  %v2723 = vadd.f32 %v2713, %v2715
  %2724 = vadd.xlane.f32.xlu0 %v2723
  %v2725 = vpop.xlane.xlu0 %2724
  %v2726 = vadd.f32 %v2719, %v2721
  %2727 = vadd.xlane.f32.xlu0 %v2726
  %v2728 = vpop.xlane.xlu0 %2727
  %v2729 = vrcp.pop 256.0
  %v2730 = vmul.f32 %v2725, %v2729
  %v2731 = vmul.f32 %v2728, %v2729
  %v2732 = vsub.f32 %v2713, %v2730
  %v2733 = vsub.f32 %v2715, %v2730
  %v2734 = vsub.f32 %v2719, %v2731
  %v2735 = vsub.f32 %v2721, %v2731
  %v2736 = vmul.f32 %v2732, %v2732
  %v2737 = vmul.f32 %v2733, %v2733
  %v2738 = vmul.f32 %v2734, %v2734
  %v2739 = vmul.f32 %v2735, %v2735
  %v2740 = vadd.f32 %v2736, %v2737
  %2741 = vadd.xlane.f32.xlu0 %v2740
  %v2742 = vpop.xlane.xlu0 %2741
  %v2743 = vadd.f32 %v2738, %v2739
  %2744 = vadd.xlane.f32.xlu0 %v2743
  %v2745 = vpop.xlane.xlu0 %2744
  %v2746 = vmul.f32 %v2742, %v2729
  %v2747 = vmul.f32 %v2745, %v2729
  %v2748 = vadd.f32 %v2746, 1e-05
  %v2749 = vadd.f32 %v2747, 1e-05
  %v2750 = vrsqrt.pop %v2748
  %v2751 = vrsqrt.pop %v2749
  %v2752 = vmul.f32 %v2732, %v2750
  %v2753 = vmul.f32 %v2733, %v2750
  %v2754 = vmul.f32 %v2734, %v2751
  %v2755 = vmul.f32 %v2735, %v2751
  %v2756 = vld [vmem:[%s6] sm:$0xff]
  %v2757 = vld [vmem:[%s6 + $0x8] sm:$0xff]
  %2759 = vset.pattern.permute.xlu0 0
  %2760 = vperm.xlu0 %2759, %v2756
  %v2761 = vpop.permute.xlu0 %2760
  %2764 = vset.pattern.permute.xlu0 0
  %2765 = vperm.xlu0 %2764, %v2757
  %v2766 = vpop.permute.xlu0 %2765
  %v2768 = vmul.f32 %v2752, %v2761
  %v2769 = vmul.f32 %v2753, %v2761
  %v2770 = vmul.f32 %v2754, %v2766
  %v2771 = vmul.f32 %v2755, %v2766
  %v2772 = vld [vmem:[%s7] sm:$0xff]
  %v2773 = vld [vmem:[%s7 + $0x8] sm:$0xff]
  %2775 = vset.pattern.permute.xlu0 0
  %2776 = vperm.xlu0 %2775, %v2772
  %v2777 = vpop.permute.xlu0 %2776
  %2780 = vset.pattern.permute.xlu0 0
  %2781 = vperm.xlu0 %2780, %v2773
  %v2782 = vpop.permute.xlu0 %2781
  %v2784 = vadd.f32 %v2768, %v2777
  %v2785 = vadd.f32 %v2769, %v2777
  %v2786 = vadd.f32 %v2770, %v2782
  %v2787 = vadd.f32 %v2771, %v2782
  %v2788 = vmax.f32 %v2784, 0.0
  %v2789 = vmax.f32 %v2785, 0.0
  %v2790 = vmax.f32 %v2786, 0.0
  %v2791 = vmax.f32 %v2787, 0.0
  %2792 = vst [vmem:[%s9] sm:$0xff] %v2788
  %2793 = vst [vmem:[%s9 + $0x8] sm:$0xff] %v2789
  %2794 = vst [vmem:[%s9 + $0x10] sm:$0xff] %v2790
  %2795 = vst [vmem:[%s9 + $0x18] sm:$0xff] %v2791
  // Predicated region
  $region45: #{seqnet_forward.1} parent=0 // pred_check
    _
  $region46: #{seqnet_forward.1} parent=0 // pred_check_branch
    %2797 = sbr.rel (0) target = $region48
  $region47: #{seqnet_forward.1} parent=0 // pred_region
    _
  $region48: #{seqnet_forward.1} parent=0 // pred_fallthru
    _
  // Predicated region
  $region49: #{seqnet_forward.1} parent=0 // pred_check
    _
  $region50: #{seqnet_forward.1} parent=0 // pred_check_branch
    %2799 = sbr.rel (0) target = $region52
  $region51: #{seqnet_forward.1} parent=0 // pred_region
    _
  $region52: #{seqnet_forward.1} parent=0 // pred_fallthru
    _

</llo_original>
